<compile_context>
chip_gen: v5e
topology: v5e:2x2
jax: 0.10.0
libtpu: 0.0.40
codegen_flags: <defaults>
</compile_context>

<pallas_src>
import functools

import jax
import jax.numpy as jnp
import numpy as np
from jax import lax
from jax.experimental import pallas as pl
from jax.experimental.pallas import tpu as pltpu


# ----------------------------------------------------------------------------
# Pallas kernel: one (batch element, H-tile) per grid step.
# ----------------------------------------------------------------------------
def _ssconv_kernel(xp_ref, w1_ref, s1_ref, b1_ref, w2_ref, s2_ref, b2_ref,
                   out_ref, *, TH, K, Cin, W, load_rows):
    # xp_ref : (1, Hp, Wp*Cin)   padded, channel-interleaved image (one batch)
    # w1_ref : (K*K, TH, W*Cin)  depthwise weights, pre-broadcast (no bcast in loop)
    # s1/b1  : (TH, W*Cin)       fused BN1 scale / shift (incl. conv1 bias)
    # w2_ref : (W*Cin, W*Cout)   block-diagonal kron(I_W, w2) for the 1x1 conv
    # s2/b2  : (TH, W*Cout)      fused BN2 scale / shift (incl. conv2 bias)
    # out_ref: (1, TH, W*Cout)
    WC = W * Cin
    t = pl.program_id(1)
    row0 = pl.multiple_of(t * TH, 8)                 # sublane-aligned tile start

    # One aligned halo load per H-tile: rows [row0, row0 + load_rows).
    xwin = xp_ref[0, pl.ds(row0, load_rows), :]      # (load_rows, Wp*Cin) f32

    # Depthwise KxK conv: 49 full-vreg FMAs on (TH, W*Cin) tiles.
    acc = jnp.zeros((TH, WC), jnp.float32)
    for kh in range(K):
        xr = xwin[kh:kh + TH, :]                     # (TH, Wp*Cin)
        for kw in range(K):
            win = xr[:, kw * Cin:kw * Cin + WC]      # shift by kw*Cin lanes
            acc = acc + win * w1_ref[kh * K + kw]

    # BN1 (folded, eval mode) + ReLU
    y1 = jnp.maximum(acc * s1_ref[...] + b1_ref[...], 0.0)

    # 1x1 conv as a single block-diagonal matmul on the MXU (no relayout).
    y2 = jnp.dot(y1, w2_ref[...], preferred_element_type=jnp.float32)

    # BN2 (folded) + ReLU, lane-dense (W*Cout) store.
    y2 = jnp.maximum(y2 * s2_ref[...] + b2_ref[...], 0.0)
    out_ref[0] = y2.astype(out_ref.dtype)


def split_separable_conv2d(x_nchw, w1_pt, b1, bn1, w2_pt, b2, bn2, *, K=7, TH=8):
    """Forward pass matching the PyTorch module (eval-mode BN).

    x_nchw : (N, Cin, H, W)    float32
    w1_pt  : (Cin, 1, K, K)    depthwise conv weight (PyTorch layout)
    w2_pt  : (Cout, Cin, 1, 1) 1x1 conv weight (PyTorch layout)
    bn1/bn2: dicts with 'gamma', 'beta', 'mean', 'var', 'eps'
    returns: (N, Cout, H, W)
    """
    N, Cin, H, W = x_nchw.shape
    Cout = w2_pt.shape[0]
    pad = (K - 1) // 2
    assert TH % 8 == 0 and H % TH == 0, "TH must divide H and be a multiple of 8"

    WC, WCo = W * Cin, W * Cout
    Wp = W + 2 * pad
    WpC = Wp * Cin

    # Rows loaded per grid step (tile + halo, rounded up to a sublane multiple).
    load_rows = int(np.ceil((TH + K - 1) / 8.0) * 8)
    Hp = max(H + 2 * pad, (H - TH) + load_rows)      # extra bottom padding is unused
    pad_top, pad_bot = pad, None
    pad_bot = Hp - H - pad_top                       # >= pad by construction

    # ---- parameter plumbing (plain JAX glue, runs once) ---------------------
    # Depthwise weights: (Cin,1,K,K) -> (K,K,Cin) -> tile over W, broadcast to TH rows.
    w1_k = jnp.transpose(w1_pt[:, 0, :, :], (1, 2, 0)).reshape(K * K, 1, 1, Cin)
    w1f = jnp.broadcast_to(w1_k, (K * K, TH, W, Cin)).reshape(K * K, TH, WC)
    w1f = w1f.astype(jnp.float32)

    # 1x1 conv as a block-diagonal (W*Cin, W*Cout) matrix: kron(I_W, w2).
    w2_mat = jnp.transpose(w2_pt[:, :, 0, 0], (1, 0)).astype(jnp.float32)   # (Cin, Cout)
    m2 = jnp.kron(jnp.eye(W, dtype=jnp.float32), w2_mat)                    # (WC, WCo)

    # Fold conv biases + eval-mode BN into per-channel scale/shift, tile over W & TH.
    s1 = bn1['gamma'] / jnp.sqrt(bn1['var'] + bn1['eps'])                   # (Cin,)
    sh1 = (b1 - bn1['mean']) * s1 + bn1['beta']
    s2 = bn2['gamma'] / jnp.sqrt(bn2['var'] + bn2['eps'])                   # (Cout,)
    sh2 = (b2 - bn2['mean']) * s2 + bn2['beta']

    def tile_ch(v, C):
        return jnp.broadcast_to(v.reshape(1, 1, C),
                                (TH, W, C)).reshape(TH, W * C).astype(jnp.float32)

    s1f, b1f = tile_ch(s1, Cin), tile_ch(sh1, Cin)
    s2f, b2f = tile_ch(s2, Cout), tile_ch(sh2, Cout)

    # NCHW -> padded, channel-interleaved (N, Hp, Wp*Cin) layout.
    x = jnp.transpose(x_nchw, (0, 2, 3, 1)).astype(jnp.float32)             # NHWC
    xp = jnp.pad(x, ((0, 0), (pad_top, pad_bot), (pad, pad), (0, 0)))
    xp = xp.reshape(N, Hp, WpC)

    kernel = functools.partial(_ssconv_kernel, TH=TH, K=K, Cin=Cin, W=W,
                               load_rows=load_rows)

    out = pl.pallas_call(
        kernel,
        out_shape=jax.ShapeDtypeStruct((N, H, WCo), jnp.float32),
        grid_spec=pltpu.PrefetchScalarGridSpec(
            num_scalar_prefetch=0,
            grid=(N, H // TH),
            in_specs=[
                pl.BlockSpec((1, Hp, WpC), lambda n, t: (n, 0, 0)),
                pl.BlockSpec((K * K, TH, WC), lambda n, t: (0, 0, 0)),
                pl.BlockSpec((TH, WC), lambda n, t: (0, 0)),
                pl.BlockSpec((TH, WC), lambda n, t: (0, 0)),
                pl.BlockSpec((WC, WCo), lambda n, t: (0, 0)),
                pl.BlockSpec((TH, WCo), lambda n, t: (0, 0)),
                pl.BlockSpec((TH, WCo), lambda n, t: (0, 0)),
            ],
            out_specs=pl.BlockSpec((1, TH, WCo), lambda n, t: (n, t, 0)),
        ),
        compiler_params=pltpu.CompilerParams(
            dimension_semantics=("parallel", "parallel"),
            vmem_limit_bytes=32 * 1024 * 1024),
    )(xp, w1f, s1f, b1f, m2, s2f, b2f)

    # Un-fold the lane-dense output and go back to NCHW.
    out = out.reshape(N, H, W, Cout)
    return jnp.transpose(out, (0, 3, 1, 2))


# ----------------------------------------------------------------------------
# Pure-JAX reference (mirrors the PyTorch forward, eval-mode BN) for checking.
# ----------------------------------------------------------------------------
def reference_forward(x, w1_pt, b1, bn1, w2_pt, b2, bn2, *, K=7):
    pad = (K - 1) // 2
    Cin = x.shape[1]
    y = lax.conv_general_dilated(
        x, w1_pt, window_strides=(1, 1), padding=[(pad, pad), (pad, pad)],
        dimension_numbers=('NCHW', 'OIHW', 'NCHW'), feature_group_count=Cin)
    y = y + b1[None, :, None, None]
    y = (y - bn1['mean'][None, :, None, None]) / jnp.sqrt(
        bn1['var'][None, :, None, None] + bn1['eps'])
    y = y * bn1['gamma'][None, :, None, None] + bn1['beta'][None, :, None, None]
    y = jnp.maximum(y, 0.0)

    y = lax.conv_general_dilated(
        y, w2_pt, window_strides=(1, 1), padding=[(0, 0), (0, 0)],
        dimension_numbers=('NCHW', 'OIHW', 'NCHW'))
    y = y + b2[None, :, None, None]
    y = (y - bn2['mean'][None, :, None, None]) / jnp.sqrt(
        bn2['var'][None, :, None, None] + bn2['eps'])
    y = y * bn2['gamma'][None, :, None, None] + bn2['beta'][None, :, None, None]
    return jnp.maximum(y, 0.0)


if __name__ == "__main__":
    # Small, deterministic setup: batch=2, in_dim=8, out_dim=16, spatial=16x16
    N, Cin, Cout, H, W, K = 2, 8, 16, 16, 16, 7
    key = jax.random.PRNGKey(0)
    kx, kw1, kb1, kw2, kb2 = jax.random.split(key, 5)

    x = jax.random.normal(kx, (N, Cin, H, W), jnp.float32)

    # Kaiming-normal (fan_out, relu) init, like the PyTorch module.
    std1 = np.sqrt(2.0 / (Cin * K * K))
    w1_pt = std1 * jax.random.normal(kw1, (Cin, 1, K, K), jnp.float32)
    b1 = 0.1 * jax.random.normal(kb1, (Cin,), jnp.float32)

    std2 = np.sqrt(2.0 / (Cout * 1 * 1))
    w2_pt = std2 * jax.random.normal(kw2, (Cout, Cin, 1, 1), jnp.float32)
    b2 = 0.1 * jax.random.normal(kb2, (Cout,), jnp.float32)

    bn1 = dict(gamma=jnp.ones((Cin,), jnp.float32),
               beta=jnp.zeros((Cin,), jnp.float32),
               mean=jnp.zeros((Cin,), jnp.float32),
               var=jnp.ones((Cin,), jnp.float32),
               eps=1e-5)
    bn2 = dict(gamma=jnp.ones((Cout,), jnp.float32),
               beta=jnp.zeros((Cout,), jnp.float32),
               mean=jnp.zeros((Cout,), jnp.float32),
               var=jnp.ones((Cout,), jnp.float32),
               eps=1e-5)

    out = split_separable_conv2d(x, w1_pt, b1, bn1, w2_pt, b2, bn2, K=K, TH=8)
    out = jax.block_until_ready(out)

    ref = jax.block_until_ready(
        reference_forward(x, w1_pt, b1, bn1, w2_pt, b2, bn2, K=K))

    np.testing.assert_allclose(np.asarray(out), np.asarray(ref),
                               rtol=1e-3, atol=1e-3)
    print("KERNEL_OK")
</pallas_src>

<mosaic_0001>
module attributes {stable_mosaic.version = 11 : i64} {
  func.func @_ssconv_kernel(%arg0: i32, %arg1: i32, %arg2: memref<1x24x176xf32, #tpu.memory_space<vmem>>, %arg3: memref<49x8x128xf32, #tpu.memory_space<vmem>>, %arg4: memref<8x128xf32, #tpu.memory_space<vmem>>, %arg5: memref<8x128xf32, #tpu.memory_space<vmem>>, %arg6: memref<128x256xf32, #tpu.memory_space<vmem>>, %arg7: memref<8x256xf32, #tpu.memory_space<vmem>>, %arg8: memref<8x256xf32, #tpu.memory_space<vmem>>, %arg9: memref<1x8x256xf32, #tpu.memory_space<vmem>>) attributes {dimension_semantics = [#tpu.dimension_semantics<parallel>, #tpu.dimension_semantics<parallel>], iteration_bounds = array<i64: 2, 2>, scalar_prefetch = 0 : i64, scratch_operands = 0 : i64, tpu.core_type = #tpu.core_type<tc>, window_params = [{transform_indices = @transform_0, window_bounds = array<i64: 1, 24, 176>}, {pipeline_mode = #tpu.pipeline_mode<synchronous>, transform_indices = @transform_1, window_bounds = array<i64: 49, 8, 128>}, {pipeline_mode = #tpu.pipeline_mode<synchronous>, transform_indices = @transform_2, window_bounds = array<i64: 8, 128>}, {pipeline_mode = #tpu.pipeline_mode<synchronous>, transform_indices = @transform_3, window_bounds = array<i64: 8, 128>}, {pipeline_mode = #tpu.pipeline_mode<synchronous>, transform_indices = @transform_4, window_bounds = array<i64: 128, 256>}, {pipeline_mode = #tpu.pipeline_mode<synchronous>, transform_indices = @transform_5, window_bounds = array<i64: 8, 256>}, {pipeline_mode = #tpu.pipeline_mode<synchronous>, transform_indices = @transform_6, window_bounds = array<i64: 8, 256>}, {transform_indices = @transform_7, window_bounds = array<i64: 1, 8, 256>}]} {
    %c8_i32 = arith.constant 8 : i32
    %0 = arith.muli %arg1, %c8_i32 : i32
    %1 = tpu.assume_multiple %0, 8 : i32
    %c0 = arith.constant 0 : index
    %2 = arith.index_cast %1 : i32 to index
    %c0_0 = arith.constant 0 : index
    %3 = vector.load %arg2[%c0, %2, %c0_0] : memref<1x24x176xf32, #tpu.memory_space<vmem>>, vector<1x16x176xf32>
    %4 = vector.shape_cast %3 : vector<1x16x176xf32> to vector<16x176xf32>
    %cst = arith.constant 0.000000e+00 : f32
    %5 = vector.broadcast %cst : f32 to vector<8x128xf32>
    %6 = vector.extract_strided_slice %4 {offsets = [0, 0], sizes = [8, 176], strides = [1, 1]} : vector<16x176xf32> to vector<8x176xf32>
    %7 = vector.extract_strided_slice %6 {offsets = [0, 0], sizes = [8, 128], strides = [1, 1]} : vector<8x176xf32> to vector<8x128xf32>
    %c0_1 = arith.constant 0 : index
    %c0_2 = arith.constant 0 : index
    %c0_3 = arith.constant 0 : index
    %8 = vector.load %arg3[%c0_1, %c0_2, %c0_3] : memref<49x8x128xf32, #tpu.memory_space<vmem>>, vector<1x8x128xf32>
    %9 = vector.shape_cast %8 : vector<1x8x128xf32> to vector<8x128xf32>
    %10 = arith.mulf %7, %9 : vector<8x128xf32>
    %11 = arith.addf %5, %10 : vector<8x128xf32>
    %12 = vector.extract_strided_slice %6 {offsets = [0, 8], sizes = [8, 128], strides = [1, 1]} : vector<8x176xf32> to vector<8x128xf32>
    %c1 = arith.constant 1 : index
    %c0_4 = arith.constant 0 : index
    %c0_5 = arith.constant 0 : index
    %13 = vector.load %arg3[%c1, %c0_4, %c0_5] : memref<49x8x128xf32, #tpu.memory_space<vmem>>, vector<1x8x128xf32>
    %14 = vector.shape_cast %13 : vector<1x8x128xf32> to vector<8x128xf32>
    %15 = arith.mulf %12, %14 : vector<8x128xf32>
    %16 = arith.addf %11, %15 : vector<8x128xf32>
    %17 = vector.extract_strided_slice %6 {offsets = [0, 16], sizes = [8, 128], strides = [1, 1]} : vector<8x176xf32> to vector<8x128xf32>
    %c2 = arith.constant 2 : index
    %c0_6 = arith.constant 0 : index
    %c0_7 = arith.constant 0 : index
    %18 = vector.load %arg3[%c2, %c0_6, %c0_7] : memref<49x8x128xf32, #tpu.memory_space<vmem>>, vector<1x8x128xf32>
    %19 = vector.shape_cast %18 : vector<1x8x128xf32> to vector<8x128xf32>
    %20 = arith.mulf %17, %19 : vector<8x128xf32>
    %21 = arith.addf %16, %20 : vector<8x128xf32>
    %22 = vector.extract_strided_slice %6 {offsets = [0, 24], sizes = [8, 128], strides = [1, 1]} : vector<8x176xf32> to vector<8x128xf32>
    %c3 = arith.constant 3 : index
    %c0_8 = arith.constant 0 : index
    %c0_9 = arith.constant 0 : index
    %23 = vector.load %arg3[%c3, %c0_8, %c0_9] : memref<49x8x128xf32, #tpu.memory_space<vmem>>, vector<1x8x128xf32>
    %24 = vector.shape_cast %23 : vector<1x8x128xf32> to vector<8x128xf32>
    %25 = arith.mulf %22, %24 : vector<8x128xf32>
    %26 = arith.addf %21, %25 : vector<8x128xf32>
    %27 = vector.extract_strided_slice %6 {offsets = [0, 32], sizes = [8, 128], strides = [1, 1]} : vector<8x176xf32> to vector<8x128xf32>
    %c4 = arith.constant 4 : index
    %c0_10 = arith.constant 0 : index
    %c0_11 = arith.constant 0 : index
    %28 = vector.load %arg3[%c4, %c0_10, %c0_11] : memref<49x8x128xf32, #tpu.memory_space<vmem>>, vector<1x8x128xf32>
    %29 = vector.shape_cast %28 : vector<1x8x128xf32> to vector<8x128xf32>
    %30 = arith.mulf %27, %29 : vector<8x128xf32>
    %31 = arith.addf %26, %30 : vector<8x128xf32>
    %32 = vector.extract_strided_slice %6 {offsets = [0, 40], sizes = [8, 128], strides = [1, 1]} : vector<8x176xf32> to vector<8x128xf32>
    %c5 = arith.constant 5 : index
    %c0_12 = arith.constant 0 : index
    %c0_13 = arith.constant 0 : index
    %33 = vector.load %arg3[%c5, %c0_12, %c0_13] : memref<49x8x128xf32, #tpu.memory_space<vmem>>, vector<1x8x128xf32>
    %34 = vector.shape_cast %33 : vector<1x8x128xf32> to vector<8x128xf32>
    %35 = arith.mulf %32, %34 : vector<8x128xf32>
    %36 = arith.addf %31, %35 : vector<8x128xf32>
    %37 = vector.extract_strided_slice %6 {offsets = [0, 48], sizes = [8, 128], strides = [1, 1]} : vector<8x176xf32> to vector<8x128xf32>
    %c6 = arith.constant 6 : index
    %c0_14 = arith.constant 0 : index
    %c0_15 = arith.constant 0 : index
    %38 = vector.load %arg3[%c6, %c0_14, %c0_15] : memref<49x8x128xf32, #tpu.memory_space<vmem>>, vector<1x8x128xf32>
    %39 = vector.shape_cast %38 : vector<1x8x128xf32> to vector<8x128xf32>
    %40 = arith.mulf %37, %39 : vector<8x128xf32>
    %41 = arith.addf %36, %40 : vector<8x128xf32>
    %42 = vector.extract_strided_slice %4 {offsets = [1, 0], sizes = [8, 176], strides = [1, 1]} : vector<16x176xf32> to vector<8x176xf32>
    %43 = vector.extract_strided_slice %42 {offsets = [0, 0], sizes = [8, 128], strides = [1, 1]} : vector<8x176xf32> to vector<8x128xf32>
    %c7 = arith.constant 7 : index
    %c0_16 = arith.constant 0 : index
    %c0_17 = arith.constant 0 : index
    %44 = vector.load %arg3[%c7, %c0_16, %c0_17] : memref<49x8x128xf32, #tpu.memory_space<vmem>>, vector<1x8x128xf32>
    %45 = vector.shape_cast %44 : vector<1x8x128xf32> to vector<8x128xf32>
    %46 = arith.mulf %43, %45 : vector<8x128xf32>
    %47 = arith.addf %41, %46 : vector<8x128xf32>
    %48 = vector.extract_strided_slice %42 {offsets = [0, 8], sizes = [8, 128], strides = [1, 1]} : vector<8x176xf32> to vector<8x128xf32>
    %c8 = arith.constant 8 : index
    %c0_18 = arith.constant 0 : index
    %c0_19 = arith.constant 0 : index
    %49 = vector.load %arg3[%c8, %c0_18, %c0_19] : memref<49x8x128xf32, #tpu.memory_space<vmem>>, vector<1x8x128xf32>
    %50 = vector.shape_cast %49 : vector<1x8x128xf32> to vector<8x128xf32>
    %51 = arith.mulf %48, %50 : vector<8x128xf32>
    %52 = arith.addf %47, %51 : vector<8x128xf32>
    %53 = vector.extract_strided_slice %42 {offsets = [0, 16], sizes = [8, 128], strides = [1, 1]} : vector<8x176xf32> to vector<8x128xf32>
    %c9 = arith.constant 9 : index
    %c0_20 = arith.constant 0 : index
    %c0_21 = arith.constant 0 : index
    %54 = vector.load %arg3[%c9, %c0_20, %c0_21] : memref<49x8x128xf32, #tpu.memory_space<vmem>>, vector<1x8x128xf32>
    %55 = vector.shape_cast %54 : vector<1x8x128xf32> to vector<8x128xf32>
    %56 = arith.mulf %53, %55 : vector<8x128xf32>
    %57 = arith.addf %52, %56 : vector<8x128xf32>
    %58 = vector.extract_strided_slice %42 {offsets = [0, 24], sizes = [8, 128], strides = [1, 1]} : vector<8x176xf32> to vector<8x128xf32>
    %c10 = arith.constant 10 : index
    %c0_22 = arith.constant 0 : index
    %c0_23 = arith.constant 0 : index
    %59 = vector.load %arg3[%c10, %c0_22, %c0_23] : memref<49x8x128xf32, #tpu.memory_space<vmem>>, vector<1x8x128xf32>
    %60 = vector.shape_cast %59 : vector<1x8x128xf32> to vector<8x128xf32>
    %61 = arith.mulf %58, %60 : vector<8x128xf32>
    %62 = arith.addf %57, %61 : vector<8x128xf32>
    %63 = vector.extract_strided_slice %42 {offsets = [0, 32], sizes = [8, 128], strides = [1, 1]} : vector<8x176xf32> to vector<8x128xf32>
    %c11 = arith.constant 11 : index
    %c0_24 = arith.constant 0 : index
    %c0_25 = arith.constant 0 : index
    %64 = vector.load %arg3[%c11, %c0_24, %c0_25] : memref<49x8x128xf32, #tpu.memory_space<vmem>>, vector<1x8x128xf32>
    %65 = vector.shape_cast %64 : vector<1x8x128xf32> to vector<8x128xf32>
    %66 = arith.mulf %63, %65 : vector<8x128xf32>
    %67 = arith.addf %62, %66 : vector<8x128xf32>
    %68 = vector.extract_strided_slice %42 {offsets = [0, 40], sizes = [8, 128], strides = [1, 1]} : vector<8x176xf32> to vector<8x128xf32>
    %c12 = arith.constant 12 : index
    %c0_26 = arith.constant 0 : index
    %c0_27 = arith.constant 0 : index
    %69 = vector.load %arg3[%c12, %c0_26, %c0_27] : memref<49x8x128xf32, #tpu.memory_space<vmem>>, vector<1x8x128xf32>
    %70 = vector.shape_cast %69 : vector<1x8x128xf32> to vector<8x128xf32>
    %71 = arith.mulf %68, %70 : vector<8x128xf32>
    %72 = arith.addf %67, %71 : vector<8x128xf32>
    %73 = vector.extract_strided_slice %42 {offsets = [0, 48], sizes = [8, 128], strides = [1, 1]} : vector<8x176xf32> to vector<8x128xf32>
    %c13 = arith.constant 13 : index
    %c0_28 = arith.constant 0 : index
    %c0_29 = arith.constant 0 : index
    %74 = vector.load %arg3[%c13, %c0_28, %c0_29] : memref<49x8x128xf32, #tpu.memory_space<vmem>>, vector<1x8x128xf32>
    %75 = vector.shape_cast %74 : vector<1x8x128xf32> to vector<8x128xf32>
    %76 = arith.mulf %73, %75 : vector<8x128xf32>
    %77 = arith.addf %72, %76 : vector<8x128xf32>
    %78 = vector.extract_strided_slice %4 {offsets = [2, 0], sizes = [8, 176], strides = [1, 1]} : vector<16x176xf32> to vector<8x176xf32>
    %79 = vector.extract_strided_slice %78 {offsets = [0, 0], sizes = [8, 128], strides = [1, 1]} : vector<8x176xf32> to vector<8x128xf32>
    %c14 = arith.constant 14 : index
    %c0_30 = arith.constant 0 : index
    %c0_31 = arith.constant 0 : index
    %80 = vector.load %arg3[%c14, %c0_30, %c0_31] : memref<49x8x128xf32, #tpu.memory_space<vmem>>, vector<1x8x128xf32>
    %81 = vector.shape_cast %80 : vector<1x8x128xf32> to vector<8x128xf32>
    %82 = arith.mulf %79, %81 : vector<8x128xf32>
    %83 = arith.addf %77, %82 : vector<8x128xf32>
    %84 = vector.extract_strided_slice %78 {offsets = [0, 8], sizes = [8, 128], strides = [1, 1]} : vector<8x176xf32> to vector<8x128xf32>
    %c15 = arith.constant 15 : index
    %c0_32 = arith.constant 0 : index
    %c0_33 = arith.constant 0 : index
    %85 = vector.load %arg3[%c15, %c0_32, %c0_33] : memref<49x8x128xf32, #tpu.memory_space<vmem>>, vector<1x8x128xf32>
    %86 = vector.shape_cast %85 : vector<1x8x128xf32> to vector<8x128xf32>
    %87 = arith.mulf %84, %86 : vector<8x128xf32>
    %88 = arith.addf %83, %87 : vector<8x128xf32>
    %89 = vector.extract_strided_slice %78 {offsets = [0, 16], sizes = [8, 128], strides = [1, 1]} : vector<8x176xf32> to vector<8x128xf32>
    %c16 = arith.constant 16 : index
    %c0_34 = arith.constant 0 : index
    %c0_35 = arith.constant 0 : index
    %90 = vector.load %arg3[%c16, %c0_34, %c0_35] : memref<49x8x128xf32, #tpu.memory_space<vmem>>, vector<1x8x128xf32>
    %91 = vector.shape_cast %90 : vector<1x8x128xf32> to vector<8x128xf32>
    %92 = arith.mulf %89, %91 : vector<8x128xf32>
    %93 = arith.addf %88, %92 : vector<8x128xf32>
    %94 = vector.extract_strided_slice %78 {offsets = [0, 24], sizes = [8, 128], strides = [1, 1]} : vector<8x176xf32> to vector<8x128xf32>
    %c17 = arith.constant 17 : index
    %c0_36 = arith.constant 0 : index
    %c0_37 = arith.constant 0 : index
    %95 = vector.load %arg3[%c17, %c0_36, %c0_37] : memref<49x8x128xf32, #tpu.memory_space<vmem>>, vector<1x8x128xf32>
    %96 = vector.shape_cast %95 : vector<1x8x128xf32> to vector<8x128xf32>
    %97 = arith.mulf %94, %96 : vector<8x128xf32>
    %98 = arith.addf %93, %97 : vector<8x128xf32>
    %99 = vector.extract_strided_slice %78 {offsets = [0, 32], sizes = [8, 128], strides = [1, 1]} : vector<8x176xf32> to vector<8x128xf32>
    %c18 = arith.constant 18 : index
    %c0_38 = arith.constant 0 : index
    %c0_39 = arith.constant 0 : index
    %100 = vector.load %arg3[%c18, %c0_38, %c0_39] : memref<49x8x128xf32, #tpu.memory_space<vmem>>, vector<1x8x128xf32>
    %101 = vector.shape_cast %100 : vector<1x8x128xf32> to vector<8x128xf32>
    %102 = arith.mulf %99, %101 : vector<8x128xf32>
    %103 = arith.addf %98, %102 : vector<8x128xf32>
    %104 = vector.extract_strided_slice %78 {offsets = [0, 40], sizes = [8, 128], strides = [1, 1]} : vector<8x176xf32> to vector<8x128xf32>
    %c19 = arith.constant 19 : index
    %c0_40 = arith.constant 0 : index
    %c0_41 = arith.constant 0 : index
    %105 = vector.load %arg3[%c19, %c0_40, %c0_41] : memref<49x8x128xf32, #tpu.memory_space<vmem>>, vector<1x8x128xf32>
    %106 = vector.shape_cast %105 : vector<1x8x128xf32> to vector<8x128xf32>
    %107 = arith.mulf %104, %106 : vector<8x128xf32>
    %108 = arith.addf %103, %107 : vector<8x128xf32>
    %109 = vector.extract_strided_slice %78 {offsets = [0, 48], sizes = [8, 128], strides = [1, 1]} : vector<8x176xf32> to vector<8x128xf32>
    %c20 = arith.constant 20 : index
    %c0_42 = arith.constant 0 : index
    %c0_43 = arith.constant 0 : index
    %110 = vector.load %arg3[%c20, %c0_42, %c0_43] : memref<49x8x128xf32, #tpu.memory_space<vmem>>, vector<1x8x128xf32>
    %111 = vector.shape_cast %110 : vector<1x8x128xf32> to vector<8x128xf32>
    %112 = arith.mulf %109, %111 : vector<8x128xf32>
    %113 = arith.addf %108, %112 : vector<8x128xf32>
    %114 = vector.extract_strided_slice %4 {offsets = [3, 0], sizes = [8, 176], strides = [1, 1]} : vector<16x176xf32> to vector<8x176xf32>
    %115 = vector.extract_strided_slice %114 {offsets = [0, 0], sizes = [8, 128], strides = [1, 1]} : vector<8x176xf32> to vector<8x128xf32>
    %c21 = arith.constant 21 : index
    %c0_44 = arith.constant 0 : index
    %c0_45 = arith.constant 0 : index
    %116 = vector.load %arg3[%c21, %c0_44, %c0_45] : memref<49x8x128xf32, #tpu.memory_space<vmem>>, vector<1x8x128xf32>
    %117 = vector.shape_cast %116 : vector<1x8x128xf32> to vector<8x128xf32>
    %118 = arith.mulf %115, %117 : vector<8x128xf32>
    %119 = arith.addf %113, %118 : vector<8x128xf32>
    %120 = vector.extract_strided_slice %114 {offsets = [0, 8], sizes = [8, 128], strides = [1, 1]} : vector<8x176xf32> to vector<8x128xf32>
    %c22 = arith.constant 22 : index
    %c0_46 = arith.constant 0 : index
    %c0_47 = arith.constant 0 : index
    %121 = vector.load %arg3[%c22, %c0_46, %c0_47] : memref<49x8x128xf32, #tpu.memory_space<vmem>>, vector<1x8x128xf32>
    %122 = vector.shape_cast %121 : vector<1x8x128xf32> to vector<8x128xf32>
    %123 = arith.mulf %120, %122 : vector<8x128xf32>
    %124 = arith.addf %119, %123 : vector<8x128xf32>
    %125 = vector.extract_strided_slice %114 {offsets = [0, 16], sizes = [8, 128], strides = [1, 1]} : vector<8x176xf32> to vector<8x128xf32>
    %c23 = arith.constant 23 : index
    %c0_48 = arith.constant 0 : index
    %c0_49 = arith.constant 0 : index
    %126 = vector.load %arg3[%c23, %c0_48, %c0_49] : memref<49x8x128xf32, #tpu.memory_space<vmem>>, vector<1x8x128xf32>
    %127 = vector.shape_cast %126 : vector<1x8x128xf32> to vector<8x128xf32>
    %128 = arith.mulf %125, %127 : vector<8x128xf32>
    %129 = arith.addf %124, %128 : vector<8x128xf32>
    %130 = vector.extract_strided_slice %114 {offsets = [0, 24], sizes = [8, 128], strides = [1, 1]} : vector<8x176xf32> to vector<8x128xf32>
    %c24 = arith.constant 24 : index
    %c0_50 = arith.constant 0 : index
    %c0_51 = arith.constant 0 : index
    %131 = vector.load %arg3[%c24, %c0_50, %c0_51] : memref<49x8x128xf32, #tpu.memory_space<vmem>>, vector<1x8x128xf32>
    %132 = vector.shape_cast %131 : vector<1x8x128xf32> to vector<8x128xf32>
    %133 = arith.mulf %130, %132 : vector<8x128xf32>
    %134 = arith.addf %129, %133 : vector<8x128xf32>
    %135 = vector.extract_strided_slice %114 {offsets = [0, 32], sizes = [8, 128], strides = [1, 1]} : vector<8x176xf32> to vector<8x128xf32>
    %c25 = arith.constant 25 : index
    %c0_52 = arith.constant 0 : index
    %c0_53 = arith.constant 0 : index
    %136 = vector.load %arg3[%c25, %c0_52, %c0_53] : memref<49x8x128xf32, #tpu.memory_space<vmem>>, vector<1x8x128xf32>
    %137 = vector.shape_cast %136 : vector<1x8x128xf32> to vector<8x128xf32>
    %138 = arith.mulf %135, %137 : vector<8x128xf32>
    %139 = arith.addf %134, %138 : vector<8x128xf32>
    %140 = vector.extract_strided_slice %114 {offsets = [0, 40], sizes = [8, 128], strides = [1, 1]} : vector<8x176xf32> to vector<8x128xf32>
    %c26 = arith.constant 26 : index
    %c0_54 = arith.constant 0 : index
    %c0_55 = arith.constant 0 : index
    %141 = vector.load %arg3[%c26, %c0_54, %c0_55] : memref<49x8x128xf32, #tpu.memory_space<vmem>>, vector<1x8x128xf32>
    %142 = vector.shape_cast %141 : vector<1x8x128xf32> to vector<8x128xf32>
    %143 = arith.mulf %140, %142 : vector<8x128xf32>
    %144 = arith.addf %139, %143 : vector<8x128xf32>
    %145 = vector.extract_strided_slice %114 {offsets = [0, 48], sizes = [8, 128], strides = [1, 1]} : vector<8x176xf32> to vector<8x128xf32>
    %c27 = arith.constant 27 : index
    %c0_56 = arith.constant 0 : index
    %c0_57 = arith.constant 0 : index
    %146 = vector.load %arg3[%c27, %c0_56, %c0_57] : memref<49x8x128xf32, #tpu.memory_space<vmem>>, vector<1x8x128xf32>
    %147 = vector.shape_cast %146 : vector<1x8x128xf32> to vector<8x128xf32>
    %148 = arith.mulf %145, %147 : vector<8x128xf32>
    %149 = arith.addf %144, %148 : vector<8x128xf32>
    %150 = vector.extract_strided_slice %4 {offsets = [4, 0], sizes = [8, 176], strides = [1, 1]} : vector<16x176xf32> to vector<8x176xf32>
    %151 = vector.extract_strided_slice %150 {offsets = [0, 0], sizes = [8, 128], strides = [1, 1]} : vector<8x176xf32> to vector<8x128xf32>
    %c28 = arith.constant 28 : index
    %c0_58 = arith.constant 0 : index
    %c0_59 = arith.constant 0 : index
    %152 = vector.load %arg3[%c28, %c0_58, %c0_59] : memref<49x8x128xf32, #tpu.memory_space<vmem>>, vector<1x8x128xf32>
    %153 = vector.shape_cast %152 : vector<1x8x128xf32> to vector<8x128xf32>
    %154 = arith.mulf %151, %153 : vector<8x128xf32>
    %155 = arith.addf %149, %154 : vector<8x128xf32>
    %156 = vector.extract_strided_slice %150 {offsets = [0, 8], sizes = [8, 128], strides = [1, 1]} : vector<8x176xf32> to vector<8x128xf32>
    %c29 = arith.constant 29 : index
    %c0_60 = arith.constant 0 : index
    %c0_61 = arith.constant 0 : index
    %157 = vector.load %arg3[%c29, %c0_60, %c0_61] : memref<49x8x128xf32, #tpu.memory_space<vmem>>, vector<1x8x128xf32>
    %158 = vector.shape_cast %157 : vector<1x8x128xf32> to vector<8x128xf32>
    %159 = arith.mulf %156, %158 : vector<8x128xf32>
    %160 = arith.addf %155, %159 : vector<8x128xf32>
    %161 = vector.extract_strided_slice %150 {offsets = [0, 16], sizes = [8, 128], strides = [1, 1]} : vector<8x176xf32> to vector<8x128xf32>
    %c30 = arith.constant 30 : index
    %c0_62 = arith.constant 0 : index
    %c0_63 = arith.constant 0 : index
    %162 = vector.load %arg3[%c30, %c0_62, %c0_63] : memref<49x8x128xf32, #tpu.memory_space<vmem>>, vector<1x8x128xf32>
    %163 = vector.shape_cast %162 : vector<1x8x128xf32> to vector<8x128xf32>
    %164 = arith.mulf %161, %163 : vector<8x128xf32>
    %165 = arith.addf %160, %164 : vector<8x128xf32>
    %166 = vector.extract_strided_slice %150 {offsets = [0, 24], sizes = [8, 128], strides = [1, 1]} : vector<8x176xf32> to vector<8x128xf32>
    %c31 = arith.constant 31 : index
    %c0_64 = arith.constant 0 : index
    %c0_65 = arith.constant 0 : index
    %167 = vector.load %arg3[%c31, %c0_64, %c0_65] : memref<49x8x128xf32, #tpu.memory_space<vmem>>, vector<1x8x128xf32>
    %168 = vector.shape_cast %167 : vector<1x8x128xf32> to vector<8x128xf32>
    %169 = arith.mulf %166, %168 : vector<8x128xf32>
    %170 = arith.addf %165, %169 : vector<8x128xf32>
    %171 = vector.extract_strided_slice %150 {offsets = [0, 32], sizes = [8, 128], strides = [1, 1]} : vector<8x176xf32> to vector<8x128xf32>
    %c32 = arith.constant 32 : index
    %c0_66 = arith.constant 0 : index
    %c0_67 = arith.constant 0 : index
    %172 = vector.load %arg3[%c32, %c0_66, %c0_67] : memref<49x8x128xf32, #tpu.memory_space<vmem>>, vector<1x8x128xf32>
    %173 = vector.shape_cast %172 : vector<1x8x128xf32> to vector<8x128xf32>
    %174 = arith.mulf %171, %173 : vector<8x128xf32>
    %175 = arith.addf %170, %174 : vector<8x128xf32>
    %176 = vector.extract_strided_slice %150 {offsets = [0, 40], sizes = [8, 128], strides = [1, 1]} : vector<8x176xf32> to vector<8x128xf32>
    %c33 = arith.constant 33 : index
    %c0_68 = arith.constant 0 : index
    %c0_69 = arith.constant 0 : index
    %177 = vector.load %arg3[%c33, %c0_68, %c0_69] : memref<49x8x128xf32, #tpu.memory_space<vmem>>, vector<1x8x128xf32>
    %178 = vector.shape_cast %177 : vector<1x8x128xf32> to vector<8x128xf32>
    %179 = arith.mulf %176, %178 : vector<8x128xf32>
    %180 = arith.addf %175, %179 : vector<8x128xf32>
    %181 = vector.extract_strided_slice %150 {offsets = [0, 48], sizes = [8, 128], strides = [1, 1]} : vector<8x176xf32> to vector<8x128xf32>
    %c34 = arith.constant 34 : index
    %c0_70 = arith.constant 0 : index
    %c0_71 = arith.constant 0 : index
    %182 = vector.load %arg3[%c34, %c0_70, %c0_71] : memref<49x8x128xf32, #tpu.memory_space<vmem>>, vector<1x8x128xf32>
    %183 = vector.shape_cast %182 : vector<1x8x128xf32> to vector<8x128xf32>
    %184 = arith.mulf %181, %183 : vector<8x128xf32>
    %185 = arith.addf %180, %184 : vector<8x128xf32>
    %186 = vector.extract_strided_slice %4 {offsets = [5, 0], sizes = [8, 176], strides = [1, 1]} : vector<16x176xf32> to vector<8x176xf32>
    %187 = vector.extract_strided_slice %186 {offsets = [0, 0], sizes = [8, 128], strides = [1, 1]} : vector<8x176xf32> to vector<8x128xf32>
    %c35 = arith.constant 35 : index
    %c0_72 = arith.constant 0 : index
    %c0_73 = arith.constant 0 : index
    %188 = vector.load %arg3[%c35, %c0_72, %c0_73] : memref<49x8x128xf32, #tpu.memory_space<vmem>>, vector<1x8x128xf32>
    %189 = vector.shape_cast %188 : vector<1x8x128xf32> to vector<8x128xf32>
    %190 = arith.mulf %187, %189 : vector<8x128xf32>
    %191 = arith.addf %185, %190 : vector<8x128xf32>
    %192 = vector.extract_strided_slice %186 {offsets = [0, 8], sizes = [8, 128], strides = [1, 1]} : vector<8x176xf32> to vector<8x128xf32>
    %c36 = arith.constant 36 : index
    %c0_74 = arith.constant 0 : index
    %c0_75 = arith.constant 0 : index
    %193 = vector.load %arg3[%c36, %c0_74, %c0_75] : memref<49x8x128xf32, #tpu.memory_space<vmem>>, vector<1x8x128xf32>
    %194 = vector.shape_cast %193 : vector<1x8x128xf32> to vector<8x128xf32>
    %195 = arith.mulf %192, %194 : vector<8x128xf32>
    %196 = arith.addf %191, %195 : vector<8x128xf32>
    %197 = vector.extract_strided_slice %186 {offsets = [0, 16], sizes = [8, 128], strides = [1, 1]} : vector<8x176xf32> to vector<8x128xf32>
    %c37 = arith.constant 37 : index
    %c0_76 = arith.constant 0 : index
    %c0_77 = arith.constant 0 : index
    %198 = vector.load %arg3[%c37, %c0_76, %c0_77] : memref<49x8x128xf32, #tpu.memory_space<vmem>>, vector<1x8x128xf32>
    %199 = vector.shape_cast %198 : vector<1x8x128xf32> to vector<8x128xf32>
    %200 = arith.mulf %197, %199 : vector<8x128xf32>
    %201 = arith.addf %196, %200 : vector<8x128xf32>
    %202 = vector.extract_strided_slice %186 {offsets = [0, 24], sizes = [8, 128], strides = [1, 1]} : vector<8x176xf32> to vector<8x128xf32>
    %c38 = arith.constant 38 : index
    %c0_78 = arith.constant 0 : index
    %c0_79 = arith.constant 0 : index
    %203 = vector.load %arg3[%c38, %c0_78, %c0_79] : memref<49x8x128xf32, #tpu.memory_space<vmem>>, vector<1x8x128xf32>
    %204 = vector.shape_cast %203 : vector<1x8x128xf32> to vector<8x128xf32>
    %205 = arith.mulf %202, %204 : vector<8x128xf32>
    %206 = arith.addf %201, %205 : vector<8x128xf32>
    %207 = vector.extract_strided_slice %186 {offsets = [0, 32], sizes = [8, 128], strides = [1, 1]} : vector<8x176xf32> to vector<8x128xf32>
    %c39 = arith.constant 39 : index
    %c0_80 = arith.constant 0 : index
    %c0_81 = arith.constant 0 : index
    %208 = vector.load %arg3[%c39, %c0_80, %c0_81] : memref<49x8x128xf32, #tpu.memory_space<vmem>>, vector<1x8x128xf32>
    %209 = vector.shape_cast %208 : vector<1x8x128xf32> to vector<8x128xf32>
    %210 = arith.mulf %207, %209 : vector<8x128xf32>
    %211 = arith.addf %206, %210 : vector<8x128xf32>
    %212 = vector.extract_strided_slice %186 {offsets = [0, 40], sizes = [8, 128], strides = [1, 1]} : vector<8x176xf32> to vector<8x128xf32>
    %c40 = arith.constant 40 : index
    %c0_82 = arith.constant 0 : index
    %c0_83 = arith.constant 0 : index
    %213 = vector.load %arg3[%c40, %c0_82, %c0_83] : memref<49x8x128xf32, #tpu.memory_space<vmem>>, vector<1x8x128xf32>
    %214 = vector.shape_cast %213 : vector<1x8x128xf32> to vector<8x128xf32>
    %215 = arith.mulf %212, %214 : vector<8x128xf32>
    %216 = arith.addf %211, %215 : vector<8x128xf32>
    %217 = vector.extract_strided_slice %186 {offsets = [0, 48], sizes = [8, 128], strides = [1, 1]} : vector<8x176xf32> to vector<8x128xf32>
    %c41 = arith.constant 41 : index
    %c0_84 = arith.constant 0 : index
    %c0_85 = arith.constant 0 : index
    %218 = vector.load %arg3[%c41, %c0_84, %c0_85] : memref<49x8x128xf32, #tpu.memory_space<vmem>>, vector<1x8x128xf32>
    %219 = vector.shape_cast %218 : vector<1x8x128xf32> to vector<8x128xf32>
    %220 = arith.mulf %217, %219 : vector<8x128xf32>
    %221 = arith.addf %216, %220 : vector<8x128xf32>
    %222 = vector.extract_strided_slice %4 {offsets = [6, 0], sizes = [8, 176], strides = [1, 1]} : vector<16x176xf32> to vector<8x176xf32>
    %223 = vector.extract_strided_slice %222 {offsets = [0, 0], sizes = [8, 128], strides = [1, 1]} : vector<8x176xf32> to vector<8x128xf32>
    %c42 = arith.constant 42 : index
    %c0_86 = arith.constant 0 : index
    %c0_87 = arith.constant 0 : index
    %224 = vector.load %arg3[%c42, %c0_86, %c0_87] : memref<49x8x128xf32, #tpu.memory_space<vmem>>, vector<1x8x128xf32>
    %225 = vector.shape_cast %224 : vector<1x8x128xf32> to vector<8x128xf32>
    %226 = arith.mulf %223, %225 : vector<8x128xf32>
    %227 = arith.addf %221, %226 : vector<8x128xf32>
    %228 = vector.extract_strided_slice %222 {offsets = [0, 8], sizes = [8, 128], strides = [1, 1]} : vector<8x176xf32> to vector<8x128xf32>
    %c43 = arith.constant 43 : index
    %c0_88 = arith.constant 0 : index
    %c0_89 = arith.constant 0 : index
    %229 = vector.load %arg3[%c43, %c0_88, %c0_89] : memref<49x8x128xf32, #tpu.memory_space<vmem>>, vector<1x8x128xf32>
    %230 = vector.shape_cast %229 : vector<1x8x128xf32> to vector<8x128xf32>
    %231 = arith.mulf %228, %230 : vector<8x128xf32>
    %232 = arith.addf %227, %231 : vector<8x128xf32>
    %233 = vector.extract_strided_slice %222 {offsets = [0, 16], sizes = [8, 128], strides = [1, 1]} : vector<8x176xf32> to vector<8x128xf32>
    %c44 = arith.constant 44 : index
    %c0_90 = arith.constant 0 : index
    %c0_91 = arith.constant 0 : index
    %234 = vector.load %arg3[%c44, %c0_90, %c0_91] : memref<49x8x128xf32, #tpu.memory_space<vmem>>, vector<1x8x128xf32>
    %235 = vector.shape_cast %234 : vector<1x8x128xf32> to vector<8x128xf32>
    %236 = arith.mulf %233, %235 : vector<8x128xf32>
    %237 = arith.addf %232, %236 : vector<8x128xf32>
    %238 = vector.extract_strided_slice %222 {offsets = [0, 24], sizes = [8, 128], strides = [1, 1]} : vector<8x176xf32> to vector<8x128xf32>
    %c45 = arith.constant 45 : index
    %c0_92 = arith.constant 0 : index
    %c0_93 = arith.constant 0 : index
    %239 = vector.load %arg3[%c45, %c0_92, %c0_93] : memref<49x8x128xf32, #tpu.memory_space<vmem>>, vector<1x8x128xf32>
    %240 = vector.shape_cast %239 : vector<1x8x128xf32> to vector<8x128xf32>
    %241 = arith.mulf %238, %240 : vector<8x128xf32>
    %242 = arith.addf %237, %241 : vector<8x128xf32>
    %243 = vector.extract_strided_slice %222 {offsets = [0, 32], sizes = [8, 128], strides = [1, 1]} : vector<8x176xf32> to vector<8x128xf32>
    %c46 = arith.constant 46 : index
    %c0_94 = arith.constant 0 : index
    %c0_95 = arith.constant 0 : index
    %244 = vector.load %arg3[%c46, %c0_94, %c0_95] : memref<49x8x128xf32, #tpu.memory_space<vmem>>, vector<1x8x128xf32>
    %245 = vector.shape_cast %244 : vector<1x8x128xf32> to vector<8x128xf32>
    %246 = arith.mulf %243, %245 : vector<8x128xf32>
    %247 = arith.addf %242, %246 : vector<8x128xf32>
    %248 = vector.extract_strided_slice %222 {offsets = [0, 40], sizes = [8, 128], strides = [1, 1]} : vector<8x176xf32> to vector<8x128xf32>
    %c47 = arith.constant 47 : index
    %c0_96 = arith.constant 0 : index
    %c0_97 = arith.constant 0 : index
    %249 = vector.load %arg3[%c47, %c0_96, %c0_97] : memref<49x8x128xf32, #tpu.memory_space<vmem>>, vector<1x8x128xf32>
    %250 = vector.shape_cast %249 : vector<1x8x128xf32> to vector<8x128xf32>
    %251 = arith.mulf %248, %250 : vector<8x128xf32>
    %252 = arith.addf %247, %251 : vector<8x128xf32>
    %253 = vector.extract_strided_slice %222 {offsets = [0, 48], sizes = [8, 128], strides = [1, 1]} : vector<8x176xf32> to vector<8x128xf32>
    %c48 = arith.constant 48 : index
    %c0_98 = arith.constant 0 : index
    %c0_99 = arith.constant 0 : index
    %254 = vector.load %arg3[%c48, %c0_98, %c0_99] : memref<49x8x128xf32, #tpu.memory_space<vmem>>, vector<1x8x128xf32>
    %255 = vector.shape_cast %254 : vector<1x8x128xf32> to vector<8x128xf32>
    %256 = arith.mulf %253, %255 : vector<8x128xf32>
    %257 = arith.addf %252, %256 : vector<8x128xf32>
    %c0_100 = arith.constant 0 : index
    %c0_101 = arith.constant 0 : index
    %258 = vector.load %arg4[%c0_100, %c0_101] : memref<8x128xf32, #tpu.memory_space<vmem>>, vector<8x128xf32>
    %259 = arith.mulf %257, %258 : vector<8x128xf32>
    %c0_102 = arith.constant 0 : index
    %c0_103 = arith.constant 0 : index
    %260 = vector.load %arg5[%c0_102, %c0_103] : memref<8x128xf32, #tpu.memory_space<vmem>>, vector<8x128xf32>
    %261 = arith.addf %259, %260 : vector<8x128xf32>
    %cst_104 = arith.constant 0.000000e+00 : f32
    %262 = vector.broadcast %cst_104 : f32 to vector<8x128xf32>
    %263 = arith.maximumf %261, %262 : vector<8x128xf32>
    %c0_105 = arith.constant 0 : index
    %c0_106 = arith.constant 0 : index
    %264 = vector.load %arg6[%c0_105, %c0_106] : memref<128x256xf32, #tpu.memory_space<vmem>>, vector<128x256xf32>
    %cst_107 = arith.constant dense<0.000000e+00> : vector<8x256xf32>
    %265 = tpu.matmul %263, %264, %cst_107 {dimension_numbers = #tpu.dot_dimension_numbers<[1], [0], [0], [1], [0, 0, 1, 1], [], []>} : vector<8x128xf32>, vector<128x256xf32>, vector<8x256xf32> -> vector<8x256xf32>
    %c0_108 = arith.constant 0 : index
    %c0_109 = arith.constant 0 : index
    %266 = vector.load %arg7[%c0_108, %c0_109] : memref<8x256xf32, #tpu.memory_space<vmem>>, vector<8x256xf32>
    %267 = arith.mulf %265, %266 : vector<8x256xf32>
    %c0_110 = arith.constant 0 : index
    %c0_111 = arith.constant 0 : index
    %268 = vector.load %arg8[%c0_110, %c0_111] : memref<8x256xf32, #tpu.memory_space<vmem>>, vector<8x256xf32>
    %269 = arith.addf %267, %268 : vector<8x256xf32>
    %cst_112 = arith.constant 0.000000e+00 : f32
    %270 = vector.broadcast %cst_112 : f32 to vector<8x256xf32>
    %271 = arith.maximumf %269, %270 : vector<8x256xf32>
    %c0_113 = arith.constant 0 : index
    %c0_114 = arith.constant 0 : index
    %c0_115 = arith.constant 0 : index
    %272 = vector.load %arg9[%c0_113, %c0_114, %c0_115] : memref<1x8x256xf32, #tpu.memory_space<vmem>>, vector<1x8x256xf32>
    %273 = vector.shape_cast %272 : vector<1x8x256xf32> to vector<8x256xf32>
    %274 = vector.shape_cast %271 : vector<8x256xf32> to vector<1x8x256xf32>
    tpu.vector_store %arg9[%c0_113, %c0_114, %c0_115], %274 {strides = array<i32>} : memref<1x8x256xf32, #tpu.memory_space<vmem>>, vector<1x8x256xf32>,
    return
  }
  func.func @transform_0(%arg0: i32, %arg1: i32) -> (i32, i32, i32) {
    %c0_i32 = arith.constant 0 : i32
    %c0_i32_0 = arith.constant 0 : i32
    %c0_i32_1 = arith.constant 0 : i32
    return %arg0, %c0_i32, %c0_i32_0 : i32, i32, i32
  }
  func.func @transform_1(%arg0: i32, %arg1: i32) -> (i32, i32, i32) {
    %c0_i32 = arith.constant 0 : i32
    %c0_i32_0 = arith.constant 0 : i32
    %c0_i32_1 = arith.constant 0 : i32
    %c0_i32_2 = arith.constant 0 : i32
    return %c0_i32, %c0_i32_0, %c0_i32_1 : i32, i32, i32
  }
  func.func @transform_2(%arg0: i32, %arg1: i32) -> (i32, i32) {
    %c0_i32 = arith.constant 0 : i32
    %c0_i32_0 = arith.constant 0 : i32
    %c0_i32_1 = arith.constant 0 : i32
    return %c0_i32, %c0_i32_0 : i32, i32
  }
  func.func @transform_3(%arg0: i32, %arg1: i32) -> (i32, i32) {
    %c0_i32 = arith.constant 0 : i32
    %c0_i32_0 = arith.constant 0 : i32
    %c0_i32_1 = arith.constant 0 : i32
    return %c0_i32, %c0_i32_0 : i32, i32
  }
  func.func @transform_4(%arg0: i32, %arg1: i32) -> (i32, i32) {
    %c0_i32 = arith.constant 0 : i32
    %c0_i32_0 = arith.constant 0 : i32
    %c0_i32_1 = arith.constant 0 : i32
    return %c0_i32, %c0_i32_0 : i32, i32
  }
  func.func @transform_5(%arg0: i32, %arg1: i32) -> (i32, i32) {
    %c0_i32 = arith.constant 0 : i32
    %c0_i32_0 = arith.constant 0 : i32
    %c0_i32_1 = arith.constant 0 : i32
    return %c0_i32, %c0_i32_0 : i32, i32
  }
  func.func @transform_6(%arg0: i32, %arg1: i32) -> (i32, i32) {
    %c0_i32 = arith.constant 0 : i32
    %c0_i32_0 = arith.constant 0 : i32
    %c0_i32_1 = arith.constant 0 : i32
    return %c0_i32, %c0_i32_0 : i32, i32
  }
  func.func @transform_7(%arg0: i32, %arg1: i32) -> (i32, i32, i32) {
    %c0_i32 = arith.constant 0 : i32
    %c0_i32_0 = arith.constant 0 : i32
    return %arg0, %arg1, %c0_i32 : i32, i32, i32
  }
}

</mosaic_0001>

<llo_original>
// kernel: tpu_custom_call.1
$region0: #{tpu_custom_call.1}
  #allocation0 [shape = 'u32[]', space=smem, size = 0x4, offset = 0x4, fixed_abs, tag = 'smem constant byte address 0x4 - core index']
  #allocation1 [shape = 'u32[72,128]{1,0:T(1,128)}', space=vmem, size = 0x9000, scoped, tag = 'internal scratch']
  %s0 = inlined_call_operand.hbm [shape: f32[2,24,176], index: 0, kind: input, shape index: {}]
  %s1 = inlined_call_operand.hbm [shape: f32[49,8,128], index: 1, kind: input, shape index: {}]
  %s2 = inlined_call_operand.hbm [shape: f32[8,128], index: 2, kind: input, shape index: {}]
  %s3 = inlined_call_operand.hbm [shape: f32[8,128], index: 3, kind: input, shape index: {}]
  %s4 = inlined_call_operand.hbm [shape: f32[128,256], index: 4, kind: input, shape index: {}]
  %s5 = inlined_call_operand.hbm [shape: f32[8,256], index: 5, kind: input, shape index: {}]
  %s6 = inlined_call_operand.hbm [shape: f32[8,256], index: 6, kind: input, shape index: {}]
  %s7 = inlined_call_operand.hbm [shape: f32[2,16,256], index: 7, kind: output, shape index: {}]
  %s8 = sld [smem:[#allocation0]]
  $region89: #{tpu_custom_call.1} parent=0
    _
  %s10 = ssub.s32 1, %s8
  %s11 = scalar_select 0, %s10, %s8
  $region1: #{tpu_custom_call.1} parent=0
    #allocation2 [shape = 'u8[49152]{0}', space=vmem, size = 0xc000, scoped, tag = 'input window, operand 0']
    #allocation3 [shape = 's32[2]{0}', space=sflag, size = 0x8, scoped, tag = 'scoped memory for tpu_custom_call.1']
    #allocation4 [shape = 's32[2]{0}', space=sflag, size = 0x8, scoped, tag = 'scoped memory for tpu_custom_call.1']
    #allocation5 [shape = 'u8[200704]{0}', space=vmem, size = 0x31000, scoped, tag = 'input window, operand 1, single buffered']
    #allocation6 [shape = 's32[1]{0}', space=sflag, size = 0x4, scoped, tag = 'scoped memory for tpu_custom_call.1']
    #allocation7 [shape = 'u8[4096]{0}', space=vmem, size = 0x1000, scoped, tag = 'input window, operand 2, single buffered']
    #allocation8 [shape = 'u8[4096]{0}', space=vmem, size = 0x1000, scoped, tag = 'input window, operand 3, single buffered']
    #allocation9 [shape = 's32[1]{0}', space=sflag, size = 0x4, scoped, tag = 'scoped memory for tpu_custom_call.1']
    #allocation10 [shape = 'u8[131072]{0}', space=vmem, size = 0x20000, scoped, tag = 'input window, operand 4, single buffered']
    #allocation11 [shape = 'u8[8192]{0}', space=vmem, size = 0x2000, scoped, tag = 'input window, operand 5, single buffered']
    #allocation12 [shape = 's32[1]{0}', space=sflag, size = 0x4, scoped, tag = 'scoped memory for tpu_custom_call.1']
    #allocation13 [shape = 'u8[8192]{0}', space=vmem, size = 0x2000, scoped, tag = 'input window, operand 6, single buffered']
    #allocation14 [shape = 'u8[16384]{0}', space=vmem, size = 0x4000, scoped, tag = 'output window, operand 0']
    %12 = vsyncpa [#allocation3], 0
    %s13 = scalar_lea.sflag [#allocation3], 1
    %14 = vsyncpa %s13, 0
    %15 = vsyncpa [#allocation6], 0
    %16 = vsyncpa [#allocation9], 0
    %17 = vsyncpa [#allocation12], 0
    %18 = vsyncpa [#allocation4], 0
    %s19 = scalar_lea.sflag [#allocation4], 1
    %20 = vsyncpa %s19, 0
    loop: start=0, step=1, limit=6
    $region2: #{tpu_custom_call.1} parent=1 // loop_pre_header
      _
    $region3: #{tpu_custom_call.1} parent=1 // loop_header
      %s22 = sphi 0, %s26
      %p23 = scmp.ge.s32.totalorder %s22, 6
      %s29 = sphi 0, %s41
      %s30 = sphi 0, %s37
      %s31 = sphi 0, %s29
      %s32 = sphi 0, %s30
      %s33 = sphi 0, %s31
      %s34 = sphi 0, %s32
      %s44 = sphi 0, %s46
      %s47 = sphi 0, %s44
      %s48 = sphi 0, %s47
      %s64 = sphi 0, %s48
      %s68 = sphi 0, %s68
      %s70 = sphi 0, %s68
      %s71 = sphi 0, %s70
      %s85 = sphi 0, %s71
      %s89 = sphi 0, %s89
      %s91 = sphi 0, %s89
      %s92 = sphi 0, %s91
      %s106 = sphi 0, %s92
      %s110 = sphi 0, %s110
      %s112 = sphi 0, %s110
      %s113 = sphi 0, %s112
      %s127 = sphi 0, %s113
      %s131 = sphi 0, %s131
      %s133 = sphi 0, %s131
      %s134 = sphi 0, %s133
      %s148 = sphi 0, %s134
      %s152 = sphi 0, %s152
      %s154 = sphi 0, %s152
      %s155 = sphi 0, %s154
      %s169 = sphi 0, %s155
      %s173 = sphi 0, %s173
      %s175 = sphi 0, %s173
      %s176 = sphi 0, %s175
      %s190 = sphi 0, %s176
      %s198 = sphi 0, %s200
      %s201 = sphi 0, %s198
      %s202 = sphi 0, %s201
      %s218 = sphi 0, %s202
    $region4: #{tpu_custom_call.1} parent=1 // loop_header_branch
      %25 = sbr.rel (%p23) target = $region8
    $region5: #{tpu_custom_call.1} parent=1 // loop_body
      %s27 = ssub.s32 %s22, 1
      %s28 = ssub.s32 %s22, 2
      %s35 = sadd.s32 1, %s30
      %p36 = scmp.ge.s32.totalorder %s35, 2
      %s37 = scalar_select %p36, 0, %s35
      %s38 = sadd.s32 1, %s29
      %s39 = scalar_select %p36, %s38, %s29
      %p40 = scmp.ge.s32.totalorder %s39, 2
      %s41 = scalar_select %p40, 0, %s39
      %s42 = ssub.s32 %s29, %s41
      %p43 = scmp.eq.s32.totalorder %s42, 0
      %s45 = sadd.s32 %s44, 1
      %s46 = scalar_select %p43, %s44, %s45
      %p49 = pneg %p43
      %p50 = scmp.eq.s32.totalorder %s22, 3
      %p51 = por %p49, %p50
      %p52 = scmp.ne.s32.totalorder %s44, %s47
      %p53 = scmp.eq.s32.totalorder %s22, 0
      %p54 = por %p52, %p53
      %p55 = scmp.ne.s32.totalorder %s44, %s47
      %p56 = scmp.eq.s32.totalorder %s27, 3
      %p57 = por %p55, %p56
      %p58 = scmp.ne.s32.totalorder %s47, %s48
      %p59 = scmp.eq.s32.totalorder %s27, 0
      %p60 = por %p58, %p59
      %p61 = scmp.ne.s32.totalorder %s47, %s48
      %p62 = scmp.eq.s32.totalorder %s28, 3
      %p63 = por %p61, %p62
      %p65 = scmp.ne.s32.totalorder %s48, %s64
      %p66 = scmp.eq.s32.totalorder %s28, 0
      %p67 = por %p65, %p66
      %s69 = sadd.s32 %s68, 1
      %p72 = scmp.eq.s32.totalorder %s22, 3
      %p73 = scmp.ne.s32.totalorder %s68, %s70
      %p74 = scmp.eq.s32.totalorder %s22, 0
      %p75 = por %p73, %p74
      %p76 = scmp.ne.s32.totalorder %s68, %s70
      %p77 = scmp.eq.s32.totalorder %s27, 3
      %p78 = por %p76, %p77
      %p79 = scmp.ne.s32.totalorder %s70, %s71
      %p80 = scmp.eq.s32.totalorder %s27, 0
      %p81 = por %p79, %p80
      %p82 = scmp.ne.s32.totalorder %s70, %s71
      %p83 = scmp.eq.s32.totalorder %s28, 3
      %p84 = por %p82, %p83
      %p86 = scmp.ne.s32.totalorder %s71, %s85
      %p87 = scmp.eq.s32.totalorder %s28, 0
      %p88 = por %p86, %p87
      %s90 = sadd.s32 %s89, 1
      %p93 = scmp.eq.s32.totalorder %s22, 3
      %p94 = scmp.ne.s32.totalorder %s89, %s91
      %p95 = scmp.eq.s32.totalorder %s22, 0
      %p96 = por %p94, %p95
      %p97 = scmp.ne.s32.totalorder %s89, %s91
      %p98 = scmp.eq.s32.totalorder %s27, 3
      %p99 = por %p97, %p98
      %p100 = scmp.ne.s32.totalorder %s91, %s92
      %p101 = scmp.eq.s32.totalorder %s27, 0
      %p102 = por %p100, %p101
      %p103 = scmp.ne.s32.totalorder %s91, %s92
      %p104 = scmp.eq.s32.totalorder %s28, 3
      %p105 = por %p103, %p104
      %p107 = scmp.ne.s32.totalorder %s92, %s106
      %p108 = scmp.eq.s32.totalorder %s28, 0
      %p109 = por %p107, %p108
      %s111 = sadd.s32 %s110, 1
      %p114 = scmp.eq.s32.totalorder %s22, 3
      %p115 = scmp.ne.s32.totalorder %s110, %s112
      %p116 = scmp.eq.s32.totalorder %s22, 0
      %p117 = por %p115, %p116
      %p118 = scmp.ne.s32.totalorder %s110, %s112
      %p119 = scmp.eq.s32.totalorder %s27, 3
      %p120 = por %p118, %p119
      %p121 = scmp.ne.s32.totalorder %s112, %s113
      %p122 = scmp.eq.s32.totalorder %s27, 0
      %p123 = por %p121, %p122
      %p124 = scmp.ne.s32.totalorder %s112, %s113
      %p125 = scmp.eq.s32.totalorder %s28, 3
      %p126 = por %p124, %p125
      %p128 = scmp.ne.s32.totalorder %s113, %s127
      %p129 = scmp.eq.s32.totalorder %s28, 0
      %p130 = por %p128, %p129
      %s132 = sadd.s32 %s131, 1
      %p135 = scmp.eq.s32.totalorder %s22, 3
      %p136 = scmp.ne.s32.totalorder %s131, %s133
      %p137 = scmp.eq.s32.totalorder %s22, 0
      %p138 = por %p136, %p137
      %p139 = scmp.ne.s32.totalorder %s131, %s133
      %p140 = scmp.eq.s32.totalorder %s27, 3
      %p141 = por %p139, %p140
      %p142 = scmp.ne.s32.totalorder %s133, %s134
      %p143 = scmp.eq.s32.totalorder %s27, 0
      %p144 = por %p142, %p143
      %p145 = scmp.ne.s32.totalorder %s133, %s134
      %p146 = scmp.eq.s32.totalorder %s28, 3
      %p147 = por %p145, %p146
      %p149 = scmp.ne.s32.totalorder %s134, %s148
      %p150 = scmp.eq.s32.totalorder %s28, 0
      %p151 = por %p149, %p150
      %s153 = sadd.s32 %s152, 1
      %p156 = scmp.eq.s32.totalorder %s22, 3
      %p157 = scmp.ne.s32.totalorder %s152, %s154
      %p158 = scmp.eq.s32.totalorder %s22, 0
      %p159 = por %p157, %p158
      %p160 = scmp.ne.s32.totalorder %s152, %s154
      %p161 = scmp.eq.s32.totalorder %s27, 3
      %p162 = por %p160, %p161
      %p163 = scmp.ne.s32.totalorder %s154, %s155
      %p164 = scmp.eq.s32.totalorder %s27, 0
      %p165 = por %p163, %p164
      %p166 = scmp.ne.s32.totalorder %s154, %s155
      %p167 = scmp.eq.s32.totalorder %s28, 3
      %p168 = por %p166, %p167
      %p170 = scmp.ne.s32.totalorder %s155, %s169
      %p171 = scmp.eq.s32.totalorder %s28, 0
      %p172 = por %p170, %p171
      %s174 = sadd.s32 %s173, 1
      %p177 = scmp.eq.s32.totalorder %s22, 3
      %p178 = scmp.ne.s32.totalorder %s173, %s175
      %p179 = scmp.eq.s32.totalorder %s22, 0
      %p180 = por %p178, %p179
      %p181 = scmp.ne.s32.totalorder %s173, %s175
      %p182 = scmp.eq.s32.totalorder %s27, 3
      %p183 = por %p181, %p182
      %p184 = scmp.ne.s32.totalorder %s175, %s176
      %p185 = scmp.eq.s32.totalorder %s27, 0
      %p186 = por %p184, %p185
      %p187 = scmp.ne.s32.totalorder %s175, %s176
      %p188 = scmp.eq.s32.totalorder %s28, 3
      %p189 = por %p187, %p188
      %p191 = scmp.ne.s32.totalorder %s176, %s190
      %p192 = scmp.eq.s32.totalorder %s28, 0
      %p193 = por %p191, %p192
      %s194 = ssub.s32 %s29, %s41
      %s195 = ssub.s32 %s30, %s37
      %s196 = sor.u32 %s194, %s195
      %p197 = scmp.eq.s32.totalorder %s196, 0
      %s199 = sadd.s32 %s198, 1
      %s200 = scalar_select %p197, %s198, %s199
      %p203 = pneg %p197
      %p204 = scmp.eq.s32.totalorder %s22, 3
      %p205 = por %p203, %p204
      %p206 = scmp.ne.s32.totalorder %s198, %s201
      %p207 = scmp.eq.s32.totalorder %s22, 0
      %p208 = por %p206, %p207
      %p209 = scmp.ne.s32.totalorder %s198, %s201
      %p210 = scmp.eq.s32.totalorder %s27, 3
      %p211 = por %p209, %p210
      %p212 = scmp.ne.s32.totalorder %s201, %s202
      %p213 = scmp.eq.s32.totalorder %s27, 0
      %p214 = por %p212, %p213
      %p215 = scmp.ne.s32.totalorder %s201, %s202
      %p216 = scmp.eq.s32.totalorder %s28, 3
      %p217 = por %p215, %p216
      %p219 = scmp.ne.s32.totalorder %s202, %s218
      %p220 = scmp.eq.s32.totalorder %s28, 0
      %p221 = por %p219, %p220
      %p222 = scmp.le.s32.totalorder 1, %s22
      %p223 = scmp.lt.s32.totalorder %s22, 5
      %p224 = pnand %p222, %p223
      %p225 = pneg %p224
      // Predicated region
      $region9: #{tpu_custom_call.1} parent=5 // pred_check
        _
      $region10: #{tpu_custom_call.1} parent=5 // pred_check_branch
        %227 = sbr.rel (%p224) target = $region12
      $region11: #{tpu_custom_call.1} parent=5 // pred_region
        %s228 = ssub.s32 %s22, 1
        // Predicated region
        $region13: #{tpu_custom_call.1} parent=11 // pred_check
          %p229 = pneg %p81
        $region14: #{tpu_custom_call.1} parent=11 // pred_check_branch
          %231 = sbr.rel (%p229) target = $region16
        $region15: #{tpu_custom_call.1} parent=11 // pred_region
          %233 = vsyncadd [#allocation6], 0
          %s234 = sshll.u32 %s1, 4
          %s235 = int_to_ptr.hbm [resolvable:$true] %s234
          %s236 = sshll.u32 [#allocation5], 4
          %s237 = int_to_ptr.vmem [resolvable:$true] %s236
          %242 = dma.hbm_to_vmem [thread:$0]  %s235, 6272, %s237, [#allocation6], 128, 128, 8
        $region16: #{tpu_custom_call.1} parent=11 // pred_fallthru
          _
        // Predicated region
        $region17: #{tpu_custom_call.1} parent=11 // pred_check
          %p243 = pneg %p102
        $region18: #{tpu_custom_call.1} parent=11 // pred_check_branch
          %245 = sbr.rel (%p243) target = $region20
        $region19: #{tpu_custom_call.1} parent=11 // pred_region
          %247 = vsyncadd [#allocation6], 0
          %s249 = sshll.u32 %s2, 4
          %s250 = int_to_ptr.hbm [resolvable:$true] %s249
          %s251 = sshll.u32 [#allocation7], 4
          %s252 = int_to_ptr.vmem [resolvable:$true] %s251
          %254 = dma.hbm_to_vmem [thread:$0]  %s250, 128, %s252, [#allocation6]
        $region20: #{tpu_custom_call.1} parent=11 // pred_fallthru
          _
        // Predicated region
        $region21: #{tpu_custom_call.1} parent=11 // pred_check
          %p255 = pneg %p123
        $region22: #{tpu_custom_call.1} parent=11 // pred_check_branch
          %257 = sbr.rel (%p255) target = $region24
        $region23: #{tpu_custom_call.1} parent=11 // pred_region
          %259 = vsyncadd [#allocation9], 0
          %s261 = sshll.u32 %s3, 4
          %s262 = int_to_ptr.hbm [resolvable:$true] %s261
          %s263 = sshll.u32 [#allocation8], 4
          %s264 = int_to_ptr.vmem [resolvable:$true] %s263
          %266 = dma.hbm_to_vmem [thread:$0]  %s262, 128, %s264, [#allocation9]
        $region24: #{tpu_custom_call.1} parent=11 // pred_fallthru
          _
        // Predicated region
        $region25: #{tpu_custom_call.1} parent=11 // pred_check
          %p267 = pneg %p144
        $region26: #{tpu_custom_call.1} parent=11 // pred_check_branch
          %269 = sbr.rel (%p267) target = $region28
        $region27: #{tpu_custom_call.1} parent=11 // pred_region
          %271 = vsyncadd [#allocation9], 0
          %s272 = sshll.u32 %s4, 4
          %s273 = int_to_ptr.hbm [resolvable:$true] %s272
          %s274 = sshll.u32 [#allocation10], 4
          %s275 = int_to_ptr.vmem [resolvable:$true] %s274
          %280 = dma.hbm_to_vmem [thread:$0]  %s273, 4096, %s275, [#allocation9], 256, 256, 16
        $region28: #{tpu_custom_call.1} parent=11 // pred_fallthru
          _
        // Predicated region
        $region29: #{tpu_custom_call.1} parent=11 // pred_check
          %p281 = pneg %p165
        $region30: #{tpu_custom_call.1} parent=11 // pred_check_branch
          %283 = sbr.rel (%p281) target = $region32
        $region31: #{tpu_custom_call.1} parent=11 // pred_region
          %285 = vsyncadd [#allocation12], 0
          %s287 = sshll.u32 %s5, 4
          %s288 = int_to_ptr.hbm [resolvable:$true] %s287
          %s289 = sshll.u32 [#allocation11], 4
          %s290 = int_to_ptr.vmem [resolvable:$true] %s289
          %292 = dma.hbm_to_vmem [thread:$0]  %s288, 256, %s290, [#allocation12]
        $region32: #{tpu_custom_call.1} parent=11 // pred_fallthru
          _
        // Predicated region
        $region33: #{tpu_custom_call.1} parent=11 // pred_check
          %p293 = pneg %p186
        $region34: #{tpu_custom_call.1} parent=11 // pred_check_branch
          %295 = sbr.rel (%p293) target = $region36
        $region35: #{tpu_custom_call.1} parent=11 // pred_region
          %297 = vsyncadd [#allocation12], 0
          %s299 = sshll.u32 %s6, 4
          %s300 = int_to_ptr.hbm [resolvable:$true] %s299
          %s301 = sshll.u32 [#allocation13], 4
          %s302 = int_to_ptr.vmem [resolvable:$true] %s301
          %304 = dma.hbm_to_vmem [thread:$0]  %s300, 256, %s302, [#allocation12]
        $region36: #{tpu_custom_call.1} parent=11 // pred_fallthru
          _
      $region12: #{tpu_custom_call.1} parent=5 // pred_fallthru
        _
      %p305 = scmp.lt.s32.totalorder %s22, 4
      // Predicated region
      $region37: #{tpu_custom_call.1} parent=5 // pred_check
        %p306 = pneg %p305
      $region38: #{tpu_custom_call.1} parent=5 // pred_check_branch
        %308 = sbr.rel (%p306) target = $region40
      $region39: #{tpu_custom_call.1} parent=5 // pred_region
        // Predicated region
        $region41: #{tpu_custom_call.1} parent=39 // pred_check
          %p309 = pneg %p54
        $region42: #{tpu_custom_call.1} parent=39 // pred_check_branch
          %311 = sbr.rel (%p309) target = $region44
        $region43: #{tpu_custom_call.1} parent=39 // pred_region
          %s312 = sand.u32 %s44, 1
          %s313 = scalar_lea.sflag [#allocation3], %s312
          %s314 = sand.u32 %s44, 1
          %s315 = smul.addr %s314, 48
          %s316 = scalar_lea.vmem [#allocation2], %s315
          %318 = vsyncadd %s313, 0
          %s319 = smul.addr %s29, 6
          %s320 = smul.addr %s319, 8
          %s321 = scalar_lea.hbm %s0, %s320
          %s322 = sshll.u32 %s321, 4
          %s323 = int_to_ptr.hbm [resolvable:$true] %s322
          %s324 = sshll.u32 %s316, 4
          %s325 = int_to_ptr.vmem [resolvable:$true] %s324
          %330 = dma.hbm_to_vmem [thread:$0]  %s323, 768, %s325, %s313, 256, 256, 16
        $region44: #{tpu_custom_call.1} parent=39 // pred_fallthru
          _
      $region40: #{tpu_custom_call.1} parent=5 // pred_fallthru
        _
      %p331 = scmp.le.s32.totalorder 1, %s22
      %p332 = scmp.lt.s32.totalorder %s22, 5
      %p333 = pnand %p331, %p332
      %p334 = pneg %p333
      // Predicated region
      $region45: #{tpu_custom_call.1} parent=5 // pred_check
        _
      $region46: #{tpu_custom_call.1} parent=5 // pred_check_branch
        %336 = sbr.rel (%p333) target = $region48
      $region47: #{tpu_custom_call.1} parent=5 // pred_region
        %s337 = ssub.s32 %s22, 1
        %s338 = sand.u32 %s47, 1
        %s339 = scalar_lea.sflag [#allocation3], %s338
        %s340 = sand.u32 %s47, 1
        %s341 = smul.addr %s340, 48
        %s342 = scalar_lea.vmem [#allocation2], %s341
        // Predicated region
        $region49: #{tpu_custom_call.1} parent=47 // pred_check
          %p343 = pneg %p60
        $region50: #{tpu_custom_call.1} parent=47 // pred_check_branch
          %345 = sbr.rel (%p343) target = $region52
        $region51: #{tpu_custom_call.1} parent=47 // pred_region
          %347 = dma.done %s339, 768
        $region52: #{tpu_custom_call.1} parent=47 // pred_fallthru
          _
        // Predicated region
        $region53: #{tpu_custom_call.1} parent=47 // pred_check
          %p348 = pneg %p81
        $region54: #{tpu_custom_call.1} parent=47 // pred_check_branch
          %350 = sbr.rel (%p348) target = $region56
        $region55: #{tpu_custom_call.1} parent=47 // pred_region
          %352 = dma.done [#allocation6], 6272
        $region56: #{tpu_custom_call.1} parent=47 // pred_fallthru
          _
        // Predicated region
        $region57: #{tpu_custom_call.1} parent=47 // pred_check
          %p353 = pneg %p102
        $region58: #{tpu_custom_call.1} parent=47 // pred_check_branch
          %355 = sbr.rel (%p353) target = $region60
        $region59: #{tpu_custom_call.1} parent=47 // pred_region
          %357 = dma.done [#allocation6], 128
        $region60: #{tpu_custom_call.1} parent=47 // pred_fallthru
          _
        // Predicated region
        $region61: #{tpu_custom_call.1} parent=47 // pred_check
          %p358 = pneg %p123
        $region62: #{tpu_custom_call.1} parent=47 // pred_check_branch
          %360 = sbr.rel (%p358) target = $region64
        $region63: #{tpu_custom_call.1} parent=47 // pred_region
          %362 = dma.done [#allocation9], 128
        $region64: #{tpu_custom_call.1} parent=47 // pred_fallthru
          _
        // Predicated region
        $region65: #{tpu_custom_call.1} parent=47 // pred_check
          %p363 = pneg %p144
        $region66: #{tpu_custom_call.1} parent=47 // pred_check_branch
          %365 = sbr.rel (%p363) target = $region68
        $region67: #{tpu_custom_call.1} parent=47 // pred_region
          %367 = dma.done [#allocation9], 4096
        $region68: #{tpu_custom_call.1} parent=47 // pred_fallthru
          _
        // Predicated region
        $region69: #{tpu_custom_call.1} parent=47 // pred_check
          %p368 = pneg %p165
        $region70: #{tpu_custom_call.1} parent=47 // pred_check_branch
          %370 = sbr.rel (%p368) target = $region72
        $region71: #{tpu_custom_call.1} parent=47 // pred_region
          %372 = dma.done [#allocation12], 256
        $region72: #{tpu_custom_call.1} parent=47 // pred_fallthru
          _
        // Predicated region
        $region73: #{tpu_custom_call.1} parent=47 // pred_check
          %p373 = pneg %p186
        $region74: #{tpu_custom_call.1} parent=47 // pred_check_branch
          %375 = sbr.rel (%p373) target = $region76
        $region75: #{tpu_custom_call.1} parent=47 // pred_region
          %377 = dma.done [#allocation12], 256
        $region76: #{tpu_custom_call.1} parent=47 // pred_fallthru
          _
        %s378 = sand.u32 %s47, 1
        %s379 = scalar_lea.sflag [#allocation3], %s378
        %s380 = sand.u32 %s47, 1
        %s381 = smul.addr %s380, 48
        %s382 = scalar_lea.vmem [#allocation2], %s381
        %p383 = pneg %p60
        %p384 = pneg %p57
        %p385 = pneg %p81
        %p386 = pneg %p78
        %p387 = pneg %p102
        %p388 = pneg %p99
        %p389 = pneg %p123
        %p390 = pneg %p120
        %p391 = pneg %p144
        %p392 = pneg %p141
        %p393 = pneg %p165
        %p394 = pneg %p162
        %p395 = pneg %p186
        %p396 = pneg %p183
        %p397 = pneg %p214
        %p398 = pneg %p211
        %s399 = sand.u32 %s201, 1
        %s400 = scalar_lea.sflag [#allocation4], %s399
        %s401 = sand.u32 %s201, 1
        %s402 = smul.addr %s401, 16
        %s403 = scalar_lea.vmem [#allocation14], %s402
        %s404 = smul.u32 %s32, 8
        %s405 = sshra.s32 %s404, 3
        %s406 = sand.u32 %s404, 7
        %s407 = smul.u32 %s405, 2
        %s408 = smul.addr %s407, 8
        %s409 = scalar_lea.vmem %s342, %s408 [#allocation2]
        %v410 = vld [vmem:[%s409] sm:$0xff]
        %v411 = vld [vmem:[%s409 + $0x8] sm:$0xff]
        %v412 = vld [vmem:[%s409 + $0x10] sm:$0xff]
        %v413 = vld [vmem:[%s409 + $0x18] sm:$0xff]
        %v414 = vld [vmem:[#allocation5] sm:$0xff]
        %v415 = vmul.f32 %v410, %v414
        %v416 = vadd.f32 %v415, 0.0
        %s417 = scalar_lea.vmem [#allocation5], 8
        %v418 = vld [vmem:[%s417] sm:$0xff]
        %420 = vrot.lane.b32.xlu0 %v418, 8
        %v421 = vpop.permute.xlu0 %420
        %v423 = vmul.f32 %v410, %v421
        %v424 = vmul.f32 %v411, %v421
        %427 = vrot.lane.b32.xlu0 %v423, 120
        %v428 = vpop.permute.xlu0 %427
        %429 = vrot.lane.b32.xlu0 %v424, 120
        %v430 = vpop.permute.xlu0 %429
        %vm431 = vcmask 982016
        %v432 = vsel %vm431, %v428, %v430
        %v434 = vadd.f32 %v416, %v432
        %s435 = scalar_lea.vmem [#allocation5], 16
        %v436 = vld [vmem:[%s435] sm:$0xff]
        %438 = vrot.lane.b32.xlu0 %v436, 16
        %v439 = vpop.permute.xlu0 %438
        %v441 = vmul.f32 %v410, %v439
        %v442 = vmul.f32 %v411, %v439
        %445 = vrot.lane.b32.xlu0 %v441, 112
        %v446 = vpop.permute.xlu0 %445
        %447 = vrot.lane.b32.xlu0 %v442, 112
        %v448 = vpop.permute.xlu0 %447
        %vm449 = vcmask 916480
        %v450 = vsel %vm449, %v446, %v448
        %v452 = vadd.f32 %v434, %v450
        %s453 = scalar_lea.vmem [#allocation5], 24
        %v454 = vld [vmem:[%s453] sm:$0xff]
        %456 = vrot.lane.b32.xlu0 %v454, 24
        %v457 = vpop.permute.xlu0 %456
        %v459 = vmul.f32 %v410, %v457
        %v460 = vmul.f32 %v411, %v457
        %463 = vrot.lane.b32.xlu0 %v459, 104
        %v464 = vpop.permute.xlu0 %463
        %465 = vrot.lane.b32.xlu0 %v460, 104
        %v466 = vpop.permute.xlu0 %465
        %vm467 = vcmask 850944
        %v468 = vsel %vm467, %v464, %v466
        %v470 = vadd.f32 %v452, %v468
        %s471 = scalar_lea.vmem [#allocation5], 32
        %v472 = vld [vmem:[%s471] sm:$0xff]
        %474 = vrot.lane.b32.xlu0 %v472, 32
        %v475 = vpop.permute.xlu0 %474
        %v477 = vmul.f32 %v410, %v475
        %v478 = vmul.f32 %v411, %v475
        %481 = vrot.lane.b32.xlu0 %v477, 96
        %v482 = vpop.permute.xlu0 %481
        %483 = vrot.lane.b32.xlu0 %v478, 96
        %v484 = vpop.permute.xlu0 %483
        %vm485 = vcmask 785408
        %v486 = vsel %vm485, %v482, %v484
        %v488 = vadd.f32 %v470, %v486
        %s489 = scalar_lea.vmem [#allocation5], 40
        %v490 = vld [vmem:[%s489] sm:$0xff]
        %492 = vrot.lane.b32.xlu0 %v490, 40
        %v493 = vpop.permute.xlu0 %492
        %v495 = vmul.f32 %v410, %v493
        %v496 = vmul.f32 %v411, %v493
        %499 = vrot.lane.b32.xlu0 %v495, 88
        %v500 = vpop.permute.xlu0 %499
        %501 = vrot.lane.b32.xlu0 %v496, 88
        %v502 = vpop.permute.xlu0 %501
        %vm503 = vcmask 719872
        %v504 = vsel %vm503, %v500, %v502
        %v506 = vadd.f32 %v488, %v504
        %s507 = scalar_lea.vmem [#allocation5], 48
        %v508 = vld [vmem:[%s507] sm:$0xff]
        %510 = vrot.lane.b32.xlu0 %v508, 48
        %v511 = vpop.permute.xlu0 %510
        %v513 = vmul.f32 %v410, %v511
        %v514 = vmul.f32 %v411, %v511
        %517 = vrot.lane.b32.xlu0 %v513, 80
        %v518 = vpop.permute.xlu0 %517
        %519 = vrot.lane.b32.xlu0 %v514, 80
        %v520 = vpop.permute.xlu0 %519
        %vm521 = vcmask 654336
        %v522 = vsel %vm521, %v518, %v520
        %v524 = vadd.f32 %v506, %v522
        %s525 = scalar_lea.vmem [#allocation5], 56
        %v526 = vld [vmem:[%s525] sm:$0xff]
        %v528 = vrot.slane %v526, 7
        %v530 = vmul.f32 %v410, %v528
        %v531 = vmul.f32 %v412, %v528
        %vm534 = vcmask 1046528
        %v535 = vrot.slane %v530, 1
        %v536 = vrot.slane %v531, 1
        %v537 = vsel %vm534, %v535, %v536
        %v539 = vadd.f32 %v524, %v537
        %s540 = scalar_lea.vmem [#allocation5], 64
        %v541 = vld [vmem:[%s540] sm:$0xff]
        %v543 = vrot.slane %v541, 7
        %544 = vrot.lane.b32.xlu0 %v543, 8
        %v545 = vpop.permute.xlu0 %544
        %v547 = vmul.f32 %v410, %v545
        %v548 = vmul.f32 %v411, %v545
        %v549 = vmul.f32 %v412, %v545
        %v550 = vmul.f32 %v413, %v545
        %v555 = vrot.slane %v547, 1
        %v556 = vrot.slane %v549, 1
        %v557 = vsel %vm534, %v555, %v556
        %v558 = vrot.slane %v548, 1
        %v559 = vrot.slane %v550, 1
        %v560 = vsel %vm534, %v558, %v559
        %561 = vrot.lane.b32.xlu0 %v557, 120
        %v562 = vpop.permute.xlu0 %561
        %563 = vrot.lane.b32.xlu0 %v560, 120
        %v564 = vpop.permute.xlu0 %563
        %v565 = vsel %vm431, %v562, %v564
        %v567 = vadd.f32 %v539, %v565
        %s568 = scalar_lea.vmem [#allocation5], 72
        %v569 = vld [vmem:[%s568] sm:$0xff]
        %v571 = vrot.slane %v569, 7
        %572 = vrot.lane.b32.xlu0 %v571, 16
        %v573 = vpop.permute.xlu0 %572
        %v575 = vmul.f32 %v410, %v573
        %v576 = vmul.f32 %v411, %v573
        %v577 = vmul.f32 %v412, %v573
        %v578 = vmul.f32 %v413, %v573
        %v583 = vrot.slane %v575, 1
        %v584 = vrot.slane %v577, 1
        %v585 = vsel %vm534, %v583, %v584
        %v586 = vrot.slane %v576, 1
        %v587 = vrot.slane %v578, 1
        %v588 = vsel %vm534, %v586, %v587
        %589 = vrot.lane.b32.xlu0 %v585, 112
        %v590 = vpop.permute.xlu0 %589
        %591 = vrot.lane.b32.xlu0 %v588, 112
        %v592 = vpop.permute.xlu0 %591
        %v593 = vsel %vm449, %v590, %v592
        %v595 = vadd.f32 %v567, %v593
        %s596 = scalar_lea.vmem [#allocation5], 80
        %v597 = vld [vmem:[%s596] sm:$0xff]
        %v599 = vrot.slane %v597, 7
        %600 = vrot.lane.b32.xlu0 %v599, 24
        %v601 = vpop.permute.xlu0 %600
        %v603 = vmul.f32 %v410, %v601
        %v604 = vmul.f32 %v411, %v601
        %v605 = vmul.f32 %v412, %v601
        %v606 = vmul.f32 %v413, %v601
        %v611 = vrot.slane %v603, 1
        %v612 = vrot.slane %v605, 1
        %v613 = vsel %vm534, %v611, %v612
        %v614 = vrot.slane %v604, 1
        %v615 = vrot.slane %v606, 1
        %v616 = vsel %vm534, %v614, %v615
        %617 = vrot.lane.b32.xlu0 %v613, 104
        %v618 = vpop.permute.xlu0 %617
        %619 = vrot.lane.b32.xlu0 %v616, 104
        %v620 = vpop.permute.xlu0 %619
        %v621 = vsel %vm467, %v618, %v620
        %v623 = vadd.f32 %v595, %v621
        %s624 = scalar_lea.vmem [#allocation5], 88
        %v625 = vld [vmem:[%s624] sm:$0xff]
        %v627 = vrot.slane %v625, 7
        %628 = vrot.lane.b32.xlu0 %v627, 32
        %v629 = vpop.permute.xlu0 %628
        %v631 = vmul.f32 %v410, %v629
        %v632 = vmul.f32 %v411, %v629
        %v633 = vmul.f32 %v412, %v629
        %v634 = vmul.f32 %v413, %v629
        %v639 = vrot.slane %v631, 1
        %v640 = vrot.slane %v633, 1
        %v641 = vsel %vm534, %v639, %v640
        %v642 = vrot.slane %v632, 1
        %v643 = vrot.slane %v634, 1
        %v644 = vsel %vm534, %v642, %v643
        %645 = vrot.lane.b32.xlu0 %v641, 96
        %v646 = vpop.permute.xlu0 %645
        %647 = vrot.lane.b32.xlu0 %v644, 96
        %v648 = vpop.permute.xlu0 %647
        %v649 = vsel %vm485, %v646, %v648
        %v651 = vadd.f32 %v623, %v649
        %s652 = scalar_lea.vmem [#allocation5], 96
        %v653 = vld [vmem:[%s652] sm:$0xff]
        %v655 = vrot.slane %v653, 7
        %656 = vrot.lane.b32.xlu0 %v655, 40
        %v657 = vpop.permute.xlu0 %656
        %v659 = vmul.f32 %v410, %v657
        %v660 = vmul.f32 %v411, %v657
        %v661 = vmul.f32 %v412, %v657
        %v662 = vmul.f32 %v413, %v657
        %v667 = vrot.slane %v659, 1
        %v668 = vrot.slane %v661, 1
        %v669 = vsel %vm534, %v667, %v668
        %v670 = vrot.slane %v660, 1
        %v671 = vrot.slane %v662, 1
        %v672 = vsel %vm534, %v670, %v671
        %673 = vrot.lane.b32.xlu0 %v669, 88
        %v674 = vpop.permute.xlu0 %673
        %675 = vrot.lane.b32.xlu0 %v672, 88
        %v676 = vpop.permute.xlu0 %675
        %v677 = vsel %vm503, %v674, %v676
        %v679 = vadd.f32 %v651, %v677
        %s680 = scalar_lea.vmem [#allocation5], 104
        %v681 = vld [vmem:[%s680] sm:$0xff]
        %v683 = vrot.slane %v681, 7
        %684 = vrot.lane.b32.xlu0 %v683, 48
        %v685 = vpop.permute.xlu0 %684
        %v687 = vmul.f32 %v410, %v685
        %v688 = vmul.f32 %v411, %v685
        %v689 = vmul.f32 %v412, %v685
        %v690 = vmul.f32 %v413, %v685
        %v695 = vrot.slane %v687, 1
        %v696 = vrot.slane %v689, 1
        %v697 = vsel %vm534, %v695, %v696
        %v698 = vrot.slane %v688, 1
        %v699 = vrot.slane %v690, 1
        %v700 = vsel %vm534, %v698, %v699
        %701 = vrot.lane.b32.xlu0 %v697, 80
        %v702 = vpop.permute.xlu0 %701
        %703 = vrot.lane.b32.xlu0 %v700, 80
        %v704 = vpop.permute.xlu0 %703
        %v705 = vsel %vm521, %v702, %v704
        %v707 = vadd.f32 %v679, %v705
        %s708 = scalar_lea.vmem [#allocation5], 112
        %v709 = vld [vmem:[%s708] sm:$0xff]
        %v711 = vrot.slane %v709, 6
        %v713 = vmul.f32 %v410, %v711
        %v714 = vmul.f32 %v412, %v711
        %vm717 = vcmask 1045504
        %v718 = vrot.slane %v713, 2
        %v719 = vrot.slane %v714, 2
        %v720 = vsel %vm717, %v718, %v719
        %v722 = vadd.f32 %v707, %v720
        %s723 = scalar_lea.vmem [#allocation5], 120
        %v724 = vld [vmem:[%s723] sm:$0xff]
        %v726 = vrot.slane %v724, 6
        %727 = vrot.lane.b32.xlu0 %v726, 8
        %v728 = vpop.permute.xlu0 %727
        %v730 = vmul.f32 %v410, %v728
        %v731 = vmul.f32 %v411, %v728
        %v732 = vmul.f32 %v412, %v728
        %v733 = vmul.f32 %v413, %v728
        %v738 = vrot.slane %v730, 2
        %v739 = vrot.slane %v732, 2
        %v740 = vsel %vm717, %v738, %v739
        %v741 = vrot.slane %v731, 2
        %v742 = vrot.slane %v733, 2
        %v743 = vsel %vm717, %v741, %v742
        %744 = vrot.lane.b32.xlu0 %v740, 120
        %v745 = vpop.permute.xlu0 %744
        %746 = vrot.lane.b32.xlu0 %v743, 120
        %v747 = vpop.permute.xlu0 %746
        %v748 = vsel %vm431, %v745, %v747
        %v750 = vadd.f32 %v722, %v748
        %s751 = scalar_lea.vmem [#allocation5], 128
        %v752 = vld [vmem:[%s751] sm:$0xff]
        %v754 = vrot.slane %v752, 6
        %755 = vrot.lane.b32.xlu0 %v754, 16
        %v756 = vpop.permute.xlu0 %755
        %v758 = vmul.f32 %v410, %v756
        %v759 = vmul.f32 %v411, %v756
        %v760 = vmul.f32 %v412, %v756
        %v761 = vmul.f32 %v413, %v756
        %v766 = vrot.slane %v758, 2
        %v767 = vrot.slane %v760, 2
        %v768 = vsel %vm717, %v766, %v767
        %v769 = vrot.slane %v759, 2
        %v770 = vrot.slane %v761, 2
        %v771 = vsel %vm717, %v769, %v770
        %772 = vrot.lane.b32.xlu0 %v768, 112
        %v773 = vpop.permute.xlu0 %772
        %774 = vrot.lane.b32.xlu0 %v771, 112
        %v775 = vpop.permute.xlu0 %774
        %v776 = vsel %vm449, %v773, %v775
        %v778 = vadd.f32 %v750, %v776
        %s779 = scalar_lea.vmem [#allocation5], 136
        %v780 = vld [vmem:[%s779] sm:$0xff]
        %v782 = vrot.slane %v780, 6
        %783 = vrot.lane.b32.xlu0 %v782, 24
        %v784 = vpop.permute.xlu0 %783
        %v786 = vmul.f32 %v410, %v784
        %v787 = vmul.f32 %v411, %v784
        %v788 = vmul.f32 %v412, %v784
        %v789 = vmul.f32 %v413, %v784
        %v794 = vrot.slane %v786, 2
        %v795 = vrot.slane %v788, 2
        %v796 = vsel %vm717, %v794, %v795
        %v797 = vrot.slane %v787, 2
        %v798 = vrot.slane %v789, 2
        %v799 = vsel %vm717, %v797, %v798
        %800 = vrot.lane.b32.xlu0 %v796, 104
        %v801 = vpop.permute.xlu0 %800
        %802 = vrot.lane.b32.xlu0 %v799, 104
        %v803 = vpop.permute.xlu0 %802
        %v804 = vsel %vm467, %v801, %v803
        %v806 = vadd.f32 %v778, %v804
        %s807 = scalar_lea.vmem [#allocation5], 144
        %v808 = vld [vmem:[%s807] sm:$0xff]
        %v810 = vrot.slane %v808, 6
        %811 = vrot.lane.b32.xlu0 %v810, 32
        %v812 = vpop.permute.xlu0 %811
        %v814 = vmul.f32 %v410, %v812
        %v815 = vmul.f32 %v411, %v812
        %v816 = vmul.f32 %v412, %v812
        %v817 = vmul.f32 %v413, %v812
        %v822 = vrot.slane %v814, 2
        %v823 = vrot.slane %v816, 2
        %v824 = vsel %vm717, %v822, %v823
        %v825 = vrot.slane %v815, 2
        %v826 = vrot.slane %v817, 2
        %v827 = vsel %vm717, %v825, %v826
        %828 = vrot.lane.b32.xlu0 %v824, 96
        %v829 = vpop.permute.xlu0 %828
        %830 = vrot.lane.b32.xlu0 %v827, 96
        %v831 = vpop.permute.xlu0 %830
        %v832 = vsel %vm485, %v829, %v831
        %v834 = vadd.f32 %v806, %v832
        %s835 = scalar_lea.vmem [#allocation5], 152
        %v836 = vld [vmem:[%s835] sm:$0xff]
        %v838 = vrot.slane %v836, 6
        %839 = vrot.lane.b32.xlu0 %v838, 40
        %v840 = vpop.permute.xlu0 %839
        %v842 = vmul.f32 %v410, %v840
        %v843 = vmul.f32 %v411, %v840
        %v844 = vmul.f32 %v412, %v840
        %v845 = vmul.f32 %v413, %v840
        %v850 = vrot.slane %v842, 2
        %v851 = vrot.slane %v844, 2
        %v852 = vsel %vm717, %v850, %v851
        %v853 = vrot.slane %v843, 2
        %v854 = vrot.slane %v845, 2
        %v855 = vsel %vm717, %v853, %v854
        %856 = vrot.lane.b32.xlu0 %v852, 88
        %v857 = vpop.permute.xlu0 %856
        %858 = vrot.lane.b32.xlu0 %v855, 88
        %v859 = vpop.permute.xlu0 %858
        %v860 = vsel %vm503, %v857, %v859
        %v862 = vadd.f32 %v834, %v860
        %s863 = scalar_lea.vmem [#allocation5], 160
        %v864 = vld [vmem:[%s863] sm:$0xff]
        %v866 = vrot.slane %v864, 6
        %867 = vrot.lane.b32.xlu0 %v866, 48
        %v868 = vpop.permute.xlu0 %867
        %v870 = vmul.f32 %v410, %v868
        %v871 = vmul.f32 %v411, %v868
        %v872 = vmul.f32 %v412, %v868
        %v873 = vmul.f32 %v413, %v868
        %v878 = vrot.slane %v870, 2
        %v879 = vrot.slane %v872, 2
        %v880 = vsel %vm717, %v878, %v879
        %v881 = vrot.slane %v871, 2
        %v882 = vrot.slane %v873, 2
        %v883 = vsel %vm717, %v881, %v882
        %884 = vrot.lane.b32.xlu0 %v880, 80
        %v885 = vpop.permute.xlu0 %884
        %886 = vrot.lane.b32.xlu0 %v883, 80
        %v887 = vpop.permute.xlu0 %886
        %v888 = vsel %vm521, %v885, %v887
        %v890 = vadd.f32 %v862, %v888
        %s891 = scalar_lea.vmem [#allocation5], 168
        %v892 = vld [vmem:[%s891] sm:$0xff]
        %v894 = vrot.slane %v892, 5
        %v896 = vmul.f32 %v410, %v894
        %v897 = vmul.f32 %v412, %v894
        %vm900 = vcmask 1044480
        %v901 = vrot.slane %v896, 3
        %v902 = vrot.slane %v897, 3
        %v903 = vsel %vm900, %v901, %v902
        %v905 = vadd.f32 %v890, %v903
        %s906 = scalar_lea.vmem [#allocation5], 176
        %v907 = vld [vmem:[%s906] sm:$0xff]
        %v909 = vrot.slane %v907, 5
        %910 = vrot.lane.b32.xlu0 %v909, 8
        %v911 = vpop.permute.xlu0 %910
        %v913 = vmul.f32 %v410, %v911
        %v914 = vmul.f32 %v411, %v911
        %v915 = vmul.f32 %v412, %v911
        %v916 = vmul.f32 %v413, %v911
        %v921 = vrot.slane %v913, 3
        %v922 = vrot.slane %v915, 3
        %v923 = vsel %vm900, %v921, %v922
        %v924 = vrot.slane %v914, 3
        %v925 = vrot.slane %v916, 3
        %v926 = vsel %vm900, %v924, %v925
        %927 = vrot.lane.b32.xlu0 %v923, 120
        %v928 = vpop.permute.xlu0 %927
        %929 = vrot.lane.b32.xlu0 %v926, 120
        %v930 = vpop.permute.xlu0 %929
        %v931 = vsel %vm431, %v928, %v930
        %v933 = vadd.f32 %v905, %v931
        %s934 = scalar_lea.vmem [#allocation5], 184
        %v935 = vld [vmem:[%s934] sm:$0xff]
        %v937 = vrot.slane %v935, 5
        %938 = vrot.lane.b32.xlu0 %v937, 16
        %v939 = vpop.permute.xlu0 %938
        %v941 = vmul.f32 %v410, %v939
        %v942 = vmul.f32 %v411, %v939
        %v943 = vmul.f32 %v412, %v939
        %v944 = vmul.f32 %v413, %v939
        %v949 = vrot.slane %v941, 3
        %v950 = vrot.slane %v943, 3
        %v951 = vsel %vm900, %v949, %v950
        %v952 = vrot.slane %v942, 3
        %v953 = vrot.slane %v944, 3
        %v954 = vsel %vm900, %v952, %v953
        %955 = vrot.lane.b32.xlu0 %v951, 112
        %v956 = vpop.permute.xlu0 %955
        %957 = vrot.lane.b32.xlu0 %v954, 112
        %v958 = vpop.permute.xlu0 %957
        %v959 = vsel %vm449, %v956, %v958
        %v961 = vadd.f32 %v933, %v959
        %s962 = scalar_lea.vmem [#allocation5], 192
        %v963 = vld [vmem:[%s962] sm:$0xff]
        %v965 = vrot.slane %v963, 5
        %966 = vrot.lane.b32.xlu0 %v965, 24
        %v967 = vpop.permute.xlu0 %966
        %v969 = vmul.f32 %v410, %v967
        %v970 = vmul.f32 %v411, %v967
        %v971 = vmul.f32 %v412, %v967
        %v972 = vmul.f32 %v413, %v967
        %v977 = vrot.slane %v969, 3
        %v978 = vrot.slane %v971, 3
        %v979 = vsel %vm900, %v977, %v978
        %v980 = vrot.slane %v970, 3
        %v981 = vrot.slane %v972, 3
        %v982 = vsel %vm900, %v980, %v981
        %983 = vrot.lane.b32.xlu0 %v979, 104
        %v984 = vpop.permute.xlu0 %983
        %985 = vrot.lane.b32.xlu0 %v982, 104
        %v986 = vpop.permute.xlu0 %985
        %v987 = vsel %vm467, %v984, %v986
        %v989 = vadd.f32 %v961, %v987
        %s990 = scalar_lea.vmem [#allocation5], 200
        %v991 = vld [vmem:[%s990] sm:$0xff]
        %v993 = vrot.slane %v991, 5
        %994 = vrot.lane.b32.xlu0 %v993, 32
        %v995 = vpop.permute.xlu0 %994
        %v997 = vmul.f32 %v410, %v995
        %v998 = vmul.f32 %v411, %v995
        %v999 = vmul.f32 %v412, %v995
        %v1000 = vmul.f32 %v413, %v995
        %v1005 = vrot.slane %v997, 3
        %v1006 = vrot.slane %v999, 3
        %v1007 = vsel %vm900, %v1005, %v1006
        %v1008 = vrot.slane %v998, 3
        %v1009 = vrot.slane %v1000, 3
        %v1010 = vsel %vm900, %v1008, %v1009
        %1011 = vrot.lane.b32.xlu0 %v1007, 96
        %v1012 = vpop.permute.xlu0 %1011
        %1013 = vrot.lane.b32.xlu0 %v1010, 96
        %v1014 = vpop.permute.xlu0 %1013
        %v1015 = vsel %vm485, %v1012, %v1014
        %v1017 = vadd.f32 %v989, %v1015
        %s1018 = scalar_lea.vmem [#allocation5], 208
        %v1019 = vld [vmem:[%s1018] sm:$0xff]
        %v1021 = vrot.slane %v1019, 5
        %1022 = vrot.lane.b32.xlu0 %v1021, 40
        %v1023 = vpop.permute.xlu0 %1022
        %v1025 = vmul.f32 %v410, %v1023
        %v1026 = vmul.f32 %v411, %v1023
        %v1027 = vmul.f32 %v412, %v1023
        %v1028 = vmul.f32 %v413, %v1023
        %v1033 = vrot.slane %v1025, 3
        %v1034 = vrot.slane %v1027, 3
        %v1035 = vsel %vm900, %v1033, %v1034
        %v1036 = vrot.slane %v1026, 3
        %v1037 = vrot.slane %v1028, 3
        %v1038 = vsel %vm900, %v1036, %v1037
        %1039 = vrot.lane.b32.xlu0 %v1035, 88
        %v1040 = vpop.permute.xlu0 %1039
        %1041 = vrot.lane.b32.xlu0 %v1038, 88
        %v1042 = vpop.permute.xlu0 %1041
        %v1043 = vsel %vm503, %v1040, %v1042
        %v1045 = vadd.f32 %v1017, %v1043
        %s1046 = scalar_lea.vmem [#allocation5], 216
        %v1047 = vld [vmem:[%s1046] sm:$0xff]
        %v1049 = vrot.slane %v1047, 5
        %1050 = vrot.lane.b32.xlu0 %v1049, 48
        %v1051 = vpop.permute.xlu0 %1050
        %v1053 = vmul.f32 %v410, %v1051
        %v1054 = vmul.f32 %v411, %v1051
        %v1055 = vmul.f32 %v412, %v1051
        %v1056 = vmul.f32 %v413, %v1051
        %v1061 = vrot.slane %v1053, 3
        %v1062 = vrot.slane %v1055, 3
        %v1063 = vsel %vm900, %v1061, %v1062
        %v1064 = vrot.slane %v1054, 3
        %v1065 = vrot.slane %v1056, 3
        %v1066 = vsel %vm900, %v1064, %v1065
        %1067 = vrot.lane.b32.xlu0 %v1063, 80
        %v1068 = vpop.permute.xlu0 %1067
        %1069 = vrot.lane.b32.xlu0 %v1066, 80
        %v1070 = vpop.permute.xlu0 %1069
        %v1071 = vsel %vm521, %v1068, %v1070
        %v1073 = vadd.f32 %v1045, %v1071
        %s1074 = scalar_lea.vmem [#allocation5], 224
        %v1075 = vld [vmem:[%s1074] sm:$0xff]
        %v1077 = vrot.slane %v1075, 4
        %v1079 = vmul.f32 %v410, %v1077
        %v1080 = vmul.f32 %v412, %v1077
        %vm1083 = vcmask 1043456
        %v1084 = vrot.slane %v1079, 4
        %v1085 = vrot.slane %v1080, 4
        %v1086 = vsel %vm1083, %v1084, %v1085
        %v1088 = vadd.f32 %v1073, %v1086
        %s1089 = scalar_lea.vmem [#allocation5], 232
        %v1090 = vld [vmem:[%s1089] sm:$0xff]
        %v1092 = vrot.slane %v1090, 4
        %1093 = vrot.lane.b32.xlu0 %v1092, 8
        %v1094 = vpop.permute.xlu0 %1093
        %v1096 = vmul.f32 %v410, %v1094
        %v1097 = vmul.f32 %v411, %v1094
        %v1098 = vmul.f32 %v412, %v1094
        %v1099 = vmul.f32 %v413, %v1094
        %v1104 = vrot.slane %v1096, 4
        %v1105 = vrot.slane %v1098, 4
        %v1106 = vsel %vm1083, %v1104, %v1105
        %v1107 = vrot.slane %v1097, 4
        %v1108 = vrot.slane %v1099, 4
        %v1109 = vsel %vm1083, %v1107, %v1108
        %1110 = vrot.lane.b32.xlu0 %v1106, 120
        %v1111 = vpop.permute.xlu0 %1110
        %1112 = vrot.lane.b32.xlu0 %v1109, 120
        %v1113 = vpop.permute.xlu0 %1112
        %v1114 = vsel %vm431, %v1111, %v1113
        %v1116 = vadd.f32 %v1088, %v1114
        %s1117 = scalar_lea.vmem [#allocation5], 240
        %v1118 = vld [vmem:[%s1117] sm:$0xff]
        %v1120 = vrot.slane %v1118, 4
        %1121 = vrot.lane.b32.xlu0 %v1120, 16
        %v1122 = vpop.permute.xlu0 %1121
        %v1124 = vmul.f32 %v410, %v1122
        %v1125 = vmul.f32 %v411, %v1122
        %v1126 = vmul.f32 %v412, %v1122
        %v1127 = vmul.f32 %v413, %v1122
        %v1132 = vrot.slane %v1124, 4
        %v1133 = vrot.slane %v1126, 4
        %v1134 = vsel %vm1083, %v1132, %v1133
        %v1135 = vrot.slane %v1125, 4
        %v1136 = vrot.slane %v1127, 4
        %v1137 = vsel %vm1083, %v1135, %v1136
        %1138 = vrot.lane.b32.xlu0 %v1134, 112
        %v1139 = vpop.permute.xlu0 %1138
        %1140 = vrot.lane.b32.xlu0 %v1137, 112
        %v1141 = vpop.permute.xlu0 %1140
        %v1142 = vsel %vm449, %v1139, %v1141
        %v1144 = vadd.f32 %v1116, %v1142
        %s1145 = scalar_lea.vmem [#allocation5], 248
        %v1146 = vld [vmem:[%s1145] sm:$0xff]
        %v1148 = vrot.slane %v1146, 4
        %1149 = vrot.lane.b32.xlu0 %v1148, 24
        %v1150 = vpop.permute.xlu0 %1149
        %v1152 = vmul.f32 %v410, %v1150
        %v1153 = vmul.f32 %v411, %v1150
        %v1154 = vmul.f32 %v412, %v1150
        %v1155 = vmul.f32 %v413, %v1150
        %v1160 = vrot.slane %v1152, 4
        %v1161 = vrot.slane %v1154, 4
        %v1162 = vsel %vm1083, %v1160, %v1161
        %v1163 = vrot.slane %v1153, 4
        %v1164 = vrot.slane %v1155, 4
        %v1165 = vsel %vm1083, %v1163, %v1164
        %1166 = vrot.lane.b32.xlu0 %v1162, 104
        %v1167 = vpop.permute.xlu0 %1166
        %1168 = vrot.lane.b32.xlu0 %v1165, 104
        %v1169 = vpop.permute.xlu0 %1168
        %v1170 = vsel %vm467, %v1167, %v1169
        %v1172 = vadd.f32 %v1144, %v1170
        %s1173 = scalar_lea.vmem [#allocation5], 256
        %v1174 = vld [vmem:[%s1173] sm:$0xff]
        %v1176 = vrot.slane %v1174, 4
        %1177 = vrot.lane.b32.xlu0 %v1176, 32
        %v1178 = vpop.permute.xlu0 %1177
        %v1180 = vmul.f32 %v410, %v1178
        %v1181 = vmul.f32 %v411, %v1178
        %v1182 = vmul.f32 %v412, %v1178
        %v1183 = vmul.f32 %v413, %v1178
        %v1188 = vrot.slane %v1180, 4
        %v1189 = vrot.slane %v1182, 4
        %v1190 = vsel %vm1083, %v1188, %v1189
        %v1191 = vrot.slane %v1181, 4
        %v1192 = vrot.slane %v1183, 4
        %v1193 = vsel %vm1083, %v1191, %v1192
        %1194 = vrot.lane.b32.xlu0 %v1190, 96
        %v1195 = vpop.permute.xlu0 %1194
        %1196 = vrot.lane.b32.xlu0 %v1193, 96
        %v1197 = vpop.permute.xlu0 %1196
        %v1198 = vsel %vm485, %v1195, %v1197
        %v1200 = vadd.f32 %v1172, %v1198
        %s1201 = scalar_lea.vmem [#allocation5], 264
        %v1202 = vld [vmem:[%s1201] sm:$0xff]
        %v1204 = vrot.slane %v1202, 4
        %1205 = vrot.lane.b32.xlu0 %v1204, 40
        %v1206 = vpop.permute.xlu0 %1205
        %v1208 = vmul.f32 %v410, %v1206
        %v1209 = vmul.f32 %v411, %v1206
        %v1210 = vmul.f32 %v412, %v1206
        %v1211 = vmul.f32 %v413, %v1206
        %v1216 = vrot.slane %v1208, 4
        %v1217 = vrot.slane %v1210, 4
        %v1218 = vsel %vm1083, %v1216, %v1217
        %v1219 = vrot.slane %v1209, 4
        %v1220 = vrot.slane %v1211, 4
        %v1221 = vsel %vm1083, %v1219, %v1220
        %1222 = vrot.lane.b32.xlu0 %v1218, 88
        %v1223 = vpop.permute.xlu0 %1222
        %1224 = vrot.lane.b32.xlu0 %v1221, 88
        %v1225 = vpop.permute.xlu0 %1224
        %v1226 = vsel %vm503, %v1223, %v1225
        %v1228 = vadd.f32 %v1200, %v1226
        %s1229 = scalar_lea.vmem [#allocation5], 272
        %v1230 = vld [vmem:[%s1229] sm:$0xff]
        %v1232 = vrot.slane %v1230, 4
        %1233 = vrot.lane.b32.xlu0 %v1232, 48
        %v1234 = vpop.permute.xlu0 %1233
        %v1236 = vmul.f32 %v410, %v1234
        %v1237 = vmul.f32 %v411, %v1234
        %v1238 = vmul.f32 %v412, %v1234
        %v1239 = vmul.f32 %v413, %v1234
        %v1244 = vrot.slane %v1236, 4
        %v1245 = vrot.slane %v1238, 4
        %v1246 = vsel %vm1083, %v1244, %v1245
        %v1247 = vrot.slane %v1237, 4
        %v1248 = vrot.slane %v1239, 4
        %v1249 = vsel %vm1083, %v1247, %v1248
        %1250 = vrot.lane.b32.xlu0 %v1246, 80
        %v1251 = vpop.permute.xlu0 %1250
        %1252 = vrot.lane.b32.xlu0 %v1249, 80
        %v1253 = vpop.permute.xlu0 %1252
        %v1254 = vsel %vm521, %v1251, %v1253
        %v1256 = vadd.f32 %v1228, %v1254
        %s1257 = scalar_lea.vmem [#allocation5], 280
        %v1258 = vld [vmem:[%s1257] sm:$0xff]
        %v1260 = vrot.slane %v1258, 3
        %v1262 = vmul.f32 %v410, %v1260
        %v1263 = vmul.f32 %v412, %v1260
        %vm1266 = vcmask 1042432
        %v1267 = vrot.slane %v1262, 5
        %v1268 = vrot.slane %v1263, 5
        %v1269 = vsel %vm1266, %v1267, %v1268
        %v1271 = vadd.f32 %v1256, %v1269
        %s1272 = scalar_lea.vmem [#allocation5], 288
        %v1273 = vld [vmem:[%s1272] sm:$0xff]
        %v1275 = vrot.slane %v1273, 3
        %1276 = vrot.lane.b32.xlu0 %v1275, 8
        %v1277 = vpop.permute.xlu0 %1276
        %v1279 = vmul.f32 %v410, %v1277
        %v1280 = vmul.f32 %v411, %v1277
        %v1281 = vmul.f32 %v412, %v1277
        %v1282 = vmul.f32 %v413, %v1277
        %v1287 = vrot.slane %v1279, 5
        %v1288 = vrot.slane %v1281, 5
        %v1289 = vsel %vm1266, %v1287, %v1288
        %v1290 = vrot.slane %v1280, 5
        %v1291 = vrot.slane %v1282, 5
        %v1292 = vsel %vm1266, %v1290, %v1291
        %1293 = vrot.lane.b32.xlu0 %v1289, 120
        %v1294 = vpop.permute.xlu0 %1293
        %1295 = vrot.lane.b32.xlu0 %v1292, 120
        %v1296 = vpop.permute.xlu0 %1295
        %v1297 = vsel %vm431, %v1294, %v1296
        %v1299 = vadd.f32 %v1271, %v1297
        %s1300 = scalar_lea.vmem [#allocation5], 296
        %v1301 = vld [vmem:[%s1300] sm:$0xff]
        %v1303 = vrot.slane %v1301, 3
        %1304 = vrot.lane.b32.xlu0 %v1303, 16
        %v1305 = vpop.permute.xlu0 %1304
        %v1307 = vmul.f32 %v410, %v1305
        %v1308 = vmul.f32 %v411, %v1305
        %v1309 = vmul.f32 %v412, %v1305
        %v1310 = vmul.f32 %v413, %v1305
        %v1315 = vrot.slane %v1307, 5
        %v1316 = vrot.slane %v1309, 5
        %v1317 = vsel %vm1266, %v1315, %v1316
        %v1318 = vrot.slane %v1308, 5
        %v1319 = vrot.slane %v1310, 5
        %v1320 = vsel %vm1266, %v1318, %v1319
        %1321 = vrot.lane.b32.xlu0 %v1317, 112
        %v1322 = vpop.permute.xlu0 %1321
        %1323 = vrot.lane.b32.xlu0 %v1320, 112
        %v1324 = vpop.permute.xlu0 %1323
        %v1325 = vsel %vm449, %v1322, %v1324
        %v1327 = vadd.f32 %v1299, %v1325
        %s1328 = scalar_lea.vmem [#allocation5], 304
        %v1329 = vld [vmem:[%s1328] sm:$0xff]
        %v1331 = vrot.slane %v1329, 3
        %1332 = vrot.lane.b32.xlu0 %v1331, 24
        %v1333 = vpop.permute.xlu0 %1332
        %v1335 = vmul.f32 %v410, %v1333
        %v1336 = vmul.f32 %v411, %v1333
        %v1337 = vmul.f32 %v412, %v1333
        %v1338 = vmul.f32 %v413, %v1333
        %v1343 = vrot.slane %v1335, 5
        %v1344 = vrot.slane %v1337, 5
        %v1345 = vsel %vm1266, %v1343, %v1344
        %v1346 = vrot.slane %v1336, 5
        %v1347 = vrot.slane %v1338, 5
        %v1348 = vsel %vm1266, %v1346, %v1347
        %1349 = vrot.lane.b32.xlu0 %v1345, 104
        %v1350 = vpop.permute.xlu0 %1349
        %1351 = vrot.lane.b32.xlu0 %v1348, 104
        %v1352 = vpop.permute.xlu0 %1351
        %v1353 = vsel %vm467, %v1350, %v1352
        %v1355 = vadd.f32 %v1327, %v1353
        %s1356 = scalar_lea.vmem [#allocation5], 312
        %v1357 = vld [vmem:[%s1356] sm:$0xff]
        %v1359 = vrot.slane %v1357, 3
        %1360 = vrot.lane.b32.xlu0 %v1359, 32
        %v1361 = vpop.permute.xlu0 %1360
        %v1363 = vmul.f32 %v410, %v1361
        %v1364 = vmul.f32 %v411, %v1361
        %v1365 = vmul.f32 %v412, %v1361
        %v1366 = vmul.f32 %v413, %v1361
        %v1371 = vrot.slane %v1363, 5
        %v1372 = vrot.slane %v1365, 5
        %v1373 = vsel %vm1266, %v1371, %v1372
        %v1374 = vrot.slane %v1364, 5
        %v1375 = vrot.slane %v1366, 5
        %v1376 = vsel %vm1266, %v1374, %v1375
        %1377 = vrot.lane.b32.xlu0 %v1373, 96
        %v1378 = vpop.permute.xlu0 %1377
        %1379 = vrot.lane.b32.xlu0 %v1376, 96
        %v1380 = vpop.permute.xlu0 %1379
        %v1381 = vsel %vm485, %v1378, %v1380
        %v1383 = vadd.f32 %v1355, %v1381
        %s1384 = scalar_lea.vmem [#allocation5], 320
        %v1385 = vld [vmem:[%s1384] sm:$0xff]
        %v1387 = vrot.slane %v1385, 3
        %1388 = vrot.lane.b32.xlu0 %v1387, 40
        %v1389 = vpop.permute.xlu0 %1388
        %v1391 = vmul.f32 %v410, %v1389
        %v1392 = vmul.f32 %v411, %v1389
        %v1393 = vmul.f32 %v412, %v1389
        %v1394 = vmul.f32 %v413, %v1389
        %v1399 = vrot.slane %v1391, 5
        %v1400 = vrot.slane %v1393, 5
        %v1401 = vsel %vm1266, %v1399, %v1400
        %v1402 = vrot.slane %v1392, 5
        %v1403 = vrot.slane %v1394, 5
        %v1404 = vsel %vm1266, %v1402, %v1403
        %1405 = vrot.lane.b32.xlu0 %v1401, 88
        %v1406 = vpop.permute.xlu0 %1405
        %1407 = vrot.lane.b32.xlu0 %v1404, 88
        %v1408 = vpop.permute.xlu0 %1407
        %v1409 = vsel %vm503, %v1406, %v1408
        %v1411 = vadd.f32 %v1383, %v1409
        %s1412 = scalar_lea.vmem [#allocation5], 328
        %v1413 = vld [vmem:[%s1412] sm:$0xff]
        %v1415 = vrot.slane %v1413, 3
        %1416 = vrot.lane.b32.xlu0 %v1415, 48
        %v1417 = vpop.permute.xlu0 %1416
        %v1419 = vmul.f32 %v410, %v1417
        %v1420 = vmul.f32 %v411, %v1417
        %v1421 = vmul.f32 %v412, %v1417
        %v1422 = vmul.f32 %v413, %v1417
        %v1427 = vrot.slane %v1419, 5
        %v1428 = vrot.slane %v1421, 5
        %v1429 = vsel %vm1266, %v1427, %v1428
        %v1430 = vrot.slane %v1420, 5
        %v1431 = vrot.slane %v1422, 5
        %v1432 = vsel %vm1266, %v1430, %v1431
        %1433 = vrot.lane.b32.xlu0 %v1429, 80
        %v1434 = vpop.permute.xlu0 %1433
        %1435 = vrot.lane.b32.xlu0 %v1432, 80
        %v1436 = vpop.permute.xlu0 %1435
        %v1437 = vsel %vm521, %v1434, %v1436
        %v1439 = vadd.f32 %v1411, %v1437
        %s1440 = scalar_lea.vmem [#allocation5], 336
        %v1441 = vld [vmem:[%s1440] sm:$0xff]
        %v1443 = vrot.slane %v1441, 2
        %v1445 = vmul.f32 %v410, %v1443
        %v1446 = vmul.f32 %v412, %v1443
        %vm1449 = vcmask 1041408
        %v1450 = vrot.slane %v1445, 6
        %v1451 = vrot.slane %v1446, 6
        %v1452 = vsel %vm1449, %v1450, %v1451
        %v1454 = vadd.f32 %v1439, %v1452
        %s1455 = scalar_lea.vmem [#allocation5], 344
        %v1456 = vld [vmem:[%s1455] sm:$0xff]
        %v1458 = vrot.slane %v1456, 2
        %1459 = vrot.lane.b32.xlu0 %v1458, 8
        %v1460 = vpop.permute.xlu0 %1459
        %v1462 = vmul.f32 %v410, %v1460
        %v1463 = vmul.f32 %v411, %v1460
        %v1464 = vmul.f32 %v412, %v1460
        %v1465 = vmul.f32 %v413, %v1460
        %v1470 = vrot.slane %v1462, 6
        %v1471 = vrot.slane %v1464, 6
        %v1472 = vsel %vm1449, %v1470, %v1471
        %v1473 = vrot.slane %v1463, 6
        %v1474 = vrot.slane %v1465, 6
        %v1475 = vsel %vm1449, %v1473, %v1474
        %1476 = vrot.lane.b32.xlu0 %v1472, 120
        %v1477 = vpop.permute.xlu0 %1476
        %1478 = vrot.lane.b32.xlu0 %v1475, 120
        %v1479 = vpop.permute.xlu0 %1478
        %v1480 = vsel %vm431, %v1477, %v1479
        %v1482 = vadd.f32 %v1454, %v1480
        %s1483 = scalar_lea.vmem [#allocation5], 352
        %v1484 = vld [vmem:[%s1483] sm:$0xff]
        %v1486 = vrot.slane %v1484, 2
        %1487 = vrot.lane.b32.xlu0 %v1486, 16
        %v1488 = vpop.permute.xlu0 %1487
        %v1490 = vmul.f32 %v410, %v1488
        %v1491 = vmul.f32 %v411, %v1488
        %v1492 = vmul.f32 %v412, %v1488
        %v1493 = vmul.f32 %v413, %v1488
        %v1498 = vrot.slane %v1490, 6
        %v1499 = vrot.slane %v1492, 6
        %v1500 = vsel %vm1449, %v1498, %v1499
        %v1501 = vrot.slane %v1491, 6
        %v1502 = vrot.slane %v1493, 6
        %v1503 = vsel %vm1449, %v1501, %v1502
        %1504 = vrot.lane.b32.xlu0 %v1500, 112
        %v1505 = vpop.permute.xlu0 %1504
        %1506 = vrot.lane.b32.xlu0 %v1503, 112
        %v1507 = vpop.permute.xlu0 %1506
        %v1508 = vsel %vm449, %v1505, %v1507
        %v1510 = vadd.f32 %v1482, %v1508
        %s1511 = scalar_lea.vmem [#allocation5], 360
        %v1512 = vld [vmem:[%s1511] sm:$0xff]
        %v1514 = vrot.slane %v1512, 2
        %1515 = vrot.lane.b32.xlu0 %v1514, 24
        %v1516 = vpop.permute.xlu0 %1515
        %v1518 = vmul.f32 %v410, %v1516
        %v1519 = vmul.f32 %v411, %v1516
        %v1520 = vmul.f32 %v412, %v1516
        %v1521 = vmul.f32 %v413, %v1516
        %v1526 = vrot.slane %v1518, 6
        %v1527 = vrot.slane %v1520, 6
        %v1528 = vsel %vm1449, %v1526, %v1527
        %v1529 = vrot.slane %v1519, 6
        %v1530 = vrot.slane %v1521, 6
        %v1531 = vsel %vm1449, %v1529, %v1530
        %1532 = vrot.lane.b32.xlu0 %v1528, 104
        %v1533 = vpop.permute.xlu0 %1532
        %1534 = vrot.lane.b32.xlu0 %v1531, 104
        %v1535 = vpop.permute.xlu0 %1534
        %v1536 = vsel %vm467, %v1533, %v1535
        %v1538 = vadd.f32 %v1510, %v1536
        %s1539 = scalar_lea.vmem [#allocation5], 368
        %v1540 = vld [vmem:[%s1539] sm:$0xff]
        %v1542 = vrot.slane %v1540, 2
        %1543 = vrot.lane.b32.xlu0 %v1542, 32
        %v1544 = vpop.permute.xlu0 %1543
        %v1546 = vmul.f32 %v410, %v1544
        %v1547 = vmul.f32 %v411, %v1544
        %v1548 = vmul.f32 %v412, %v1544
        %v1549 = vmul.f32 %v413, %v1544
        %v1554 = vrot.slane %v1546, 6
        %v1555 = vrot.slane %v1548, 6
        %v1556 = vsel %vm1449, %v1554, %v1555
        %v1557 = vrot.slane %v1547, 6
        %v1558 = vrot.slane %v1549, 6
        %v1559 = vsel %vm1449, %v1557, %v1558
        %1560 = vrot.lane.b32.xlu0 %v1556, 96
        %v1561 = vpop.permute.xlu0 %1560
        %1562 = vrot.lane.b32.xlu0 %v1559, 96
        %v1563 = vpop.permute.xlu0 %1562
        %v1564 = vsel %vm485, %v1561, %v1563
        %v1566 = vadd.f32 %v1538, %v1564
        %s1567 = scalar_lea.vmem [#allocation5], 376
        %v1568 = vld [vmem:[%s1567] sm:$0xff]
        %v1570 = vrot.slane %v1568, 2
        %1571 = vrot.lane.b32.xlu0 %v1570, 40
        %v1572 = vpop.permute.xlu0 %1571
        %v1574 = vmul.f32 %v410, %v1572
        %v1575 = vmul.f32 %v411, %v1572
        %v1576 = vmul.f32 %v412, %v1572
        %v1577 = vmul.f32 %v413, %v1572
        %v1582 = vrot.slane %v1574, 6
        %v1583 = vrot.slane %v1576, 6
        %v1584 = vsel %vm1449, %v1582, %v1583
        %v1585 = vrot.slane %v1575, 6
        %v1586 = vrot.slane %v1577, 6
        %v1587 = vsel %vm1449, %v1585, %v1586
        %1588 = vrot.lane.b32.xlu0 %v1584, 88
        %v1589 = vpop.permute.xlu0 %1588
        %1590 = vrot.lane.b32.xlu0 %v1587, 88
        %v1591 = vpop.permute.xlu0 %1590
        %v1592 = vsel %vm503, %v1589, %v1591
        %v1594 = vadd.f32 %v1566, %v1592
        %s1595 = scalar_lea.vmem [#allocation5], 384
        %v1596 = vld [vmem:[%s1595] sm:$0xff]
        %v1598 = vrot.slane %v1596, 2
        %1599 = vrot.lane.b32.xlu0 %v1598, 48
        %v1600 = vpop.permute.xlu0 %1599
        %v1602 = vmul.f32 %v410, %v1600
        %v1603 = vmul.f32 %v411, %v1600
        %v1604 = vmul.f32 %v412, %v1600
        %v1605 = vmul.f32 %v413, %v1600
        %v1610 = vrot.slane %v1602, 6
        %v1611 = vrot.slane %v1604, 6
        %v1612 = vsel %vm1449, %v1610, %v1611
        %v1613 = vrot.slane %v1603, 6
        %v1614 = vrot.slane %v1605, 6
        %v1615 = vsel %vm1449, %v1613, %v1614
        %1616 = vrot.lane.b32.xlu0 %v1612, 80
        %v1617 = vpop.permute.xlu0 %1616
        %1618 = vrot.lane.b32.xlu0 %v1615, 80
        %v1619 = vpop.permute.xlu0 %1618
        %v1620 = vsel %vm521, %v1617, %v1619
        %v1622 = vadd.f32 %v1594, %v1620
        %v1623 = vld [vmem:[#allocation7] sm:$0xff]
        %v1624 = vmul.f32 %v1622, %v1623
        %v1625 = vld [vmem:[#allocation8] sm:$0xff]
        %v1626 = vadd.f32 %v1624, %v1625
        %v1627 = vmax.f32 %v1626, 0.0
        %v1628 = vld [vmem:[#allocation10] sm:$0xff]
        %v1629 = vld [vmem:[#allocation10 + $0x8] sm:$0xff]
        %v1630 = vld [vmem:[#allocation10 + $0x10] sm:$0xff]
        %v1631 = vld [vmem:[#allocation10 + $0x18] sm:$0xff]
        %v1632 = vld [vmem:[#allocation10 + $0x20] sm:$0xff]
        %v1633 = vld [vmem:[#allocation10 + $0x28] sm:$0xff]
        %v1634 = vld [vmem:[#allocation10 + $0x30] sm:$0xff]
        %v1635 = vld [vmem:[#allocation10 + $0x38] sm:$0xff]
        %v1636 = vld [vmem:[#allocation10 + $0x40] sm:$0xff]
        %v1637 = vld [vmem:[#allocation10 + $0x48] sm:$0xff]
        %v1638 = vld [vmem:[#allocation10 + $0x50] sm:$0xff]
        %v1639 = vld [vmem:[#allocation10 + $0x58] sm:$0xff]
        %v1640 = vld [vmem:[#allocation10 + $0x60] sm:$0xff]
        %v1641 = vld [vmem:[#allocation10 + $0x68] sm:$0xff]
        %v1642 = vld [vmem:[#allocation10 + $0x70] sm:$0xff]
        %v1643 = vld [vmem:[#allocation10 + $0x78] sm:$0xff]
        %v1644 = vld [vmem:[#allocation10 + $0x80] sm:$0xff]
        %v1645 = vld [vmem:[#allocation10 + $0x88] sm:$0xff]
        %v1646 = vld [vmem:[#allocation10 + $0x90] sm:$0xff]
        %v1647 = vld [vmem:[#allocation10 + $0x98] sm:$0xff]
        %v1648 = vld [vmem:[#allocation10 + $0xa0] sm:$0xff]
        %v1649 = vld [vmem:[#allocation10 + $0xa8] sm:$0xff]
        %v1650 = vld [vmem:[#allocation10 + $0xb0] sm:$0xff]
        %v1651 = vld [vmem:[#allocation10 + $0xb8] sm:$0xff]
        %v1652 = vld [vmem:[#allocation10 + $0xc0] sm:$0xff]
        %v1653 = vld [vmem:[#allocation10 + $0xc8] sm:$0xff]
        %v1654 = vld [vmem:[#allocation10 + $0xd0] sm:$0xff]
        %v1655 = vld [vmem:[#allocation10 + $0xd8] sm:$0xff]
        %v1656 = vld [vmem:[#allocation10 + $0xe0] sm:$0xff]
        %v1657 = vld [vmem:[#allocation10 + $0xe8] sm:$0xff]
        %v1658 = vld [vmem:[#allocation10 + $0xf0] sm:$0xff]
        %v1659 = vld [vmem:[#allocation10 + $0xf8] sm:$0xff]
        %1660 = vmatpush.msra.mxu0 %v1658
        %1661 = vmatpush.msra.mxu0 %v1656
        %1662 = vmatpush.msra.mxu0 %v1654
        %1663 = vmatpush.msra.mxu0 %v1652
        %1664 = vmatpush.msra.mxu0 %v1650
        %1665 = vmatpush.msra.mxu0 %v1648
        %1666 = vmatpush.msra.mxu0 %v1646
        %1667 = vmatpush.msra.mxu0 %v1644
        %1668 = vmatpush.msra.mxu0 %v1642
        %1669 = vmatpush.msra.mxu0 %v1640
        %1670 = vmatpush.msra.mxu0 %v1638
        %1671 = vmatpush.msra.mxu0 %v1636
        %1672 = vmatpush.msra.mxu0 %v1634
        %1673 = vmatpush.msra.mxu0 %v1632
        %1674 = vmatpush.msra.mxu0 %v1630
        %1675 = vmatpush.msra.mxu0 %v1628
        %1676 = vmatmul.f32.gmra.mxu0 %v1627
        %v1677 = vpop.f32.mrf.mxu0
        %v1678 = vadd.f32 0.0, %v1677
        %1679 = vdwg.mxu0
        %1680 = vmatpush.msra.mxu0 %v1659
        %1681 = vmatpush.msra.mxu0 %v1657
        %1682 = vmatpush.msra.mxu0 %v1655
        %1683 = vmatpush.msra.mxu0 %v1653
        %1684 = vmatpush.msra.mxu0 %v1651
        %1685 = vmatpush.msra.mxu0 %v1649
        %1686 = vmatpush.msra.mxu0 %v1647
        %1687 = vmatpush.msra.mxu0 %v1645
        %1688 = vmatpush.msra.mxu0 %v1643
        %1689 = vmatpush.msra.mxu0 %v1641
        %1690 = vmatpush.msra.mxu0 %v1639
        %1691 = vmatpush.msra.mxu0 %v1637
        %1692 = vmatpush.msra.mxu0 %v1635
        %1693 = vmatpush.msra.mxu0 %v1633
        %1694 = vmatpush.msra.mxu0 %v1631
        %1695 = vmatpush.msra.mxu0 %v1629
        %1696 = vmatmul.f32.gmra.mxu0 %v1627
        %v1697 = vpop.f32.mrf.mxu0
        %v1698 = vadd.f32 0.0, %v1697
        %1699 = vdwg.mxu0
        %v1700 = vld [vmem:[#allocation11] sm:$0xff]
        %v1701 = vld [vmem:[#allocation11 + $0x8] sm:$0xff]
        %v1702 = vmul.f32 %v1678, %v1700
        %v1703 = vmul.f32 %v1698, %v1701
        %v1704 = vld [vmem:[#allocation13] sm:$0xff]
        %v1705 = vld [vmem:[#allocation13 + $0x8] sm:$0xff]
        %v1706 = vadd.f32 %v1702, %v1704
        %v1707 = vadd.f32 %v1703, %v1705
        %v1708 = vmax.f32 %v1706, 0.0
        %v1709 = vmax.f32 %v1707, 0.0
        %1710 = vst [vmem:[%s403] sm:$0xff] %v1708
        %1711 = vst [vmem:[%s403 + $0x8] sm:$0xff] %v1709
        %s1712 = sand.u32 %s201, 1
        %s1713 = scalar_lea.sflag [#allocation4], %s1712
        %s1714 = sand.u32 %s201, 1
        %s1715 = smul.addr %s1714, 16
        %s1716 = scalar_lea.vmem [#allocation14], %s1715
        // Predicated region
        $region77: #{tpu_custom_call.1} parent=47 // pred_check
          %p1717 = pneg %p211
        $region78: #{tpu_custom_call.1} parent=47 // pred_check_branch
          %1719 = sbr.rel (%p1717) target = $region80
        $region79: #{tpu_custom_call.1} parent=47 // pred_region
          %1721 = vsyncadd %s1713, 0
          %s1722 = smul.addr %s32, 2
          %s1723 = smul.addr %s31, 4
          %s1724 = sadd.s32 %s1722, %s1723
          %s1725 = smul.addr %s1724, 8
          %s1726 = scalar_lea.hbm %s7, %s1725
          %s1728 = sshll.u32 %s1716, 4
          %s1729 = int_to_ptr.vmem [resolvable:$true] %s1728
          %s1730 = sshll.u32 %s1726, 4
          %s1731 = int_to_ptr.hbm [resolvable:$true] %s1730
          %1733 = dma.vmem_to_hbm [thread:$0]  %s1729, 256, %s1731, %s1713
        $region80: #{tpu_custom_call.1} parent=47 // pred_fallthru
          _
      $region48: #{tpu_custom_call.1} parent=5 // pred_fallthru
        _
      %p1734 = scmp.le.s32.totalorder 2, %s22
      // Predicated region
      $region81: #{tpu_custom_call.1} parent=5 // pred_check
        %p1735 = pneg %p1734
      $region82: #{tpu_custom_call.1} parent=5 // pred_check_branch
        %1737 = sbr.rel (%p1735) target = $region84
      $region83: #{tpu_custom_call.1} parent=5 // pred_region
        %s1738 = ssub.s32 %s22, 2
        // Predicated region
        $region85: #{tpu_custom_call.1} parent=83 // pred_check
          %p1739 = pneg %p217
        $region86: #{tpu_custom_call.1} parent=83 // pred_check_branch
          %1741 = sbr.rel (%p1739) target = $region88
        $region87: #{tpu_custom_call.1} parent=83 // pred_region
          %s1742 = sand.u32 %s202, 1
          %s1743 = scalar_lea.sflag [#allocation4], %s1742
          %s1744 = sand.u32 %s202, 1
          %s1745 = smul.addr %s1744, 16
          %s1746 = scalar_lea.vmem [#allocation14], %s1745
          %1748 = dma.done %s1743, 256
        $region88: #{tpu_custom_call.1} parent=83 // pred_fallthru
          _
      $region84: #{tpu_custom_call.1} parent=5 // pred_fallthru
        _
    $region6: #{tpu_custom_call.1} parent=1 // loop_footer
      %s26 = sadd.s32 1, %s22
    $region7: #{tpu_custom_call.1} parent=1 // loop_footer_branch
      %21 = sbr.rel target = $region3
    $region8: #{tpu_custom_call.1} parent=1 // loop_exit
      _
    %1749 = vsyncpa [#allocation3], 1
    %s1750 = scalar_lea.sflag [#allocation3], 1
    %1751 = vsyncpa %s1750, 1
    %1752 = vsyncpa [#allocation6], 1
    %1753 = vsyncpa [#allocation9], 1
    %1754 = vsyncpa [#allocation12], 1
    %1755 = vsyncpa [#allocation4], 1
    %s1756 = scalar_lea.sflag [#allocation4], 1
    %1757 = vsyncpa %s1756, 1

</llo_original>
